<compile_context>
chip_gen: v7x
topology: tpu7x:2x2x1
jax: 0.10.0
libtpu: 0.0.40
codegen_flags: <defaults>
</compile_context>

<pallas_src>
import functools
import numpy as np
import jax
import jax.numpy as jnp
from jax.experimental import pallas as pl
from jax.experimental.pallas import tpu as pltpu


# ----------------------------- host-side helpers (numpy) --------------------
def _window_partition_np(x, ws):
    B, H, W, C = x.shape
    x = x.reshape(B, H // ws, ws, W // ws, ws, C)
    return x.transpose(0, 1, 3, 2, 4, 5).reshape(-1, ws, ws, C)


def build_relative_coords_table(ws):
    # relative_coords_table_type == 'norm8_log'
    rc = np.arange(-(ws - 1), ws, dtype=np.float32)
    table = np.stack(np.meshgrid(rc, rc, indexing="ij")).transpose(1, 2, 0)[None]
    table = table / (ws - 1)
    table = table * 8.0
    table = np.sign(table) * np.log2(np.abs(table) + 1.0) / np.log2(8.0)
    return table.astype(np.float32)                      # (1, 2ws-1, 2ws-1, 2)


def build_relative_position_index(ws):
    coords = np.stack(np.meshgrid(np.arange(ws), np.arange(ws), indexing="ij"))
    cf = coords.reshape(2, -1)
    rel = cf[:, :, None] - cf[:, None, :]
    rel = rel.transpose(1, 2, 0).astype(np.int64)
    rel[..., 0] += ws - 1
    rel[..., 1] += ws - 1
    rel[..., 0] *= 2 * ws - 1
    return rel.sum(-1).astype(np.int32)                  # (N, N)


def build_attn_mask(H, W, ws, ss):
    nW = (H // ws) * (W // ws)
    if ss == 0:
        return np.zeros((nW, ws * ws, ws * ws), dtype=np.float32)
    img_mask = np.zeros((1, H, W, 1), dtype=np.float32)
    h_slices = (slice(0, -ws), slice(-ws, -ss), slice(-ss, None))
    w_slices = (slice(0, -ws), slice(-ws, -ss), slice(-ss, None))
    cnt = 0
    for h in h_slices:
        for w in w_slices:
            img_mask[:, h, w, :] = cnt
            cnt += 1
    mw = _window_partition_np(img_mask, ws).reshape(-1, ws * ws)
    am = mw[:, None, :] - mw[:, :, None]
    return np.where(am != 0, -100.0, 0.0).astype(np.float32)   # (nW, N, N)


# ----------------------------- small JAX pieces ------------------------------
def _rpe_bias(p, N, num_heads):
    # log-CPB MLP (2 -> hidden -> num_heads, ReLU, no bias on 2nd layer).
    # TODO(synk): tiny (49x2 @ 2x64 @ 64x4) one-time table -- kept in plain
    # JAX, not a hot path, not worth a kernel.
    t = p["rpe_table"].reshape(-1, 2)
    h = jax.nn.relu(t @ p["rpe_w1"].T + p["rpe_b1"])
    tbl = h @ p["rpe_w2"].T                                    # (T, nH)
    rpb = tbl[p["rpi"].reshape(-1)].reshape(N, N, num_heads)
    return rpb.transpose(2, 0, 1).astype(jnp.float32)          # (nH, N, N)


def prepare_attention_params(p, num_heads):
    """One-time host-side weight prep:
      * fold the q scale (head_dim**-0.5) into the q columns of W_qkv / q_bias
      * assemble the (q_bias, zeros, v_bias) qkv bias
      * store MXU-side weights as bf16 (accumulation stays f32 in the kernel)
    """
    C = p["w_qkv_t"].shape[0]
    head_dim = C // num_heads
    scale = head_dim ** -0.5
    col_scale = jnp.concatenate([jnp.full((C,), scale, jnp.float32),
                                 jnp.ones((2 * C,), jnp.float32)])
    qkv_bias = jnp.concatenate([p["q_bias"] * scale,
                                jnp.zeros_like(p["v_bias"]),
                                p["v_bias"]])
    return {
        "w_qkv_bf": (p["w_qkv_t"] * col_scale[None, :]).astype(jnp.bfloat16),
        "qkv_bias_full": qkv_bias[None, :],                    # (1, 3C) f32
        "w_proj_bf": p["w_proj_t"].astype(jnp.bfloat16),
        "b_proj_2d": p["b_proj"][None, :],                     # (1, C) f32
    }


# ----------------------------- Pallas kernel ---------------------------------
def _window_attention_kernel(x_ref, wqkv_ref, bqkv_ref, rpb_ref, mask_ref,
                             wproj_ref, bproj_ref, o_ref, oh_ref, *,
                             num_heads, head_dim, bw, n, nw):
    """BW windows per grid step, flattened to (BW*N, C) rows.

    One wide QKV matmul -> per-head attention batched over the BW windows ->
    head outputs staged in a (rows, C) bf16 VMEM scratch -> ONE K=C output
    projection matmul.
    """
    C = num_heads * head_dim
    g = bw // nw                                               # window groups per mask repeat

    # Wide QKV matmul: x streamed in bf16, f32 accumulation, bias add in f32,
    # then a single cast of the whole (rows, 3C) intermediate to bf16.
    qkv = jnp.dot(x_ref[...], wqkv_ref[...],
                  preferred_element_type=jnp.float32) + bqkv_ref[...]
    qkv = qkv.astype(jnp.bfloat16)                             # (rows, 3C) bf16

    mask = mask_ref[...]                                       # (nW, n, n) f32

    for h in range(num_heads):                                 # static, small (nH=4)
        qh = qkv[:, h * head_dim:(h + 1) * head_dim].reshape(bw, n, head_dim)
        kh = qkv[:, C + h * head_dim:C + (h + 1) * head_dim].reshape(bw, n, head_dim)
        vh = qkv[:, 2 * C + h * head_dim:2 * C + (h + 1) * head_dim].reshape(bw, n, head_dim)

        # scores, batched over windows (q already carries the 1/sqrt(hd) scale)
        s = jnp.einsum("bnd,bmd->bnm", qh, kh,
                       preferred_element_type=jnp.float32)     # (bw, n, n) f32

        # rel-pos bias + shift mask combined ONCE per head into (nW, n, n),
        # then a single broadcast add over the scores (leading-dim reshape is
        # layout-free; requires bw % nW == 0 and nW-aligned grid steps).
        bias_h = rpb_ref[h][None] + mask                       # (nW, n, n)
        s = (s.reshape(g, nw, n, n) + bias_h[None]).reshape(bw, n, n)

        # softmax in f32; divide on the EUP via approx reciprocal
        m = jnp.max(s, axis=-1, keepdims=True)
        e = jnp.exp(s - m)
        den = jnp.sum(e, axis=-1, keepdims=True)
        pattn = e * pl.reciprocal(den, approx=True)

        oh = jnp.einsum("bnm,bmd->bnd", pattn.astype(jnp.bfloat16), vh,
                        preferred_element_type=jnp.float32)    # (bw, n, hd)

        # stage this head's output at its lane offset in the scratch (plain
        # ref store, no cross-lane concat, no per-head projection matmul)
        oh_ref[:, h * head_dim:(h + 1) * head_dim] = (
            oh.reshape(bw * n, head_dim).astype(jnp.bfloat16))

    # single output projection with full K=C contraction (fills the MXU)
    out = jnp.dot(oh_ref[...], wproj_ref[...],
                  preferred_element_type=jnp.float32)          # (rows, C) f32
    o_ref[...] = out + bproj_ref[...]


def window_attention(x_windows, mask, p, num_heads):
    """Swin-V2 WindowAttention forward. x_windows: (num_windows*B, N, C)."""
    B_, N, C = x_windows.shape
    head_dim = C // num_heads

    rpb = _rpe_bias(p, N, num_heads)                           # (nH, N, N) f32

    if mask is None:
        mask = jnp.zeros((1, N, N), jnp.float32)
    mask = mask.astype(jnp.float32)
    nW = mask.shape[0]
    assert B_ % nW == 0, "num windows must be a multiple of the mask count"

    # Windows per grid step: a multiple of nW (so every step starts nW-aligned
    # and the per-window mask pattern is identical), dividing B_. Grow toward
    # ~512 rows per step, but keep the grid length >= 2 so v7x's two
    # TensorCores both get a share of the "parallel" window axis.
    bw = nW
    while (B_ % (2 * bw) == 0) and ((2 * bw) * N <= 512) and (B_ // (2 * bw) >= 2):
        bw *= 2
    rows = bw * N
    grid_len = B_ // bw

    # Stream activations in bf16 (halves the input DMA); output kept f32 to
    # match the module's dtype.  TODO(synk): emit bf16 output if the consumer
    # accepts it (halves the write DMA too).
    x_flat = x_windows.reshape(B_ * N, C).astype(jnp.bfloat16)

    # Explicit scoped-VMEM budget: double-buffered in/out tiles + resident
    # (double-buffered) weights/bias/rpb/mask + qkv intermediate + head scratch,
    # with headroom; capped below v7x's 64 MiB physical VMEM.
    est = (2 * rows * C * 2                    # x tile, bf16, 2 buffers
           + 2 * rows * C * 4                  # out tile, f32, 2 buffers
           + 2 * 2 * (C * 3 * C + C * C)       # W_qkv + W_proj, bf16, 2 buffers
           + 2 * 4 * (3 * C + C)               # biases, f32, 2 buffers
           + 2 * 4 * (num_heads + nW) * N * N  # rpb + mask, f32, 2 buffers
           + rows * 3 * C * 4                  # qkv intermediate (vregs/VMEM)
           + rows * C * 2)                     # bf16 head-output scratch
    vmem_limit = min(2 * int(est) + (16 << 20), 48 << 20)

    kernel = functools.partial(_window_attention_kernel, num_heads=num_heads,
                               head_dim=head_dim, bw=bw, n=N, nw=nW)
    out = pl.pallas_call(
        kernel,
        out_shape=jax.ShapeDtypeStruct((B_ * N, C), jnp.float32),
        grid=(grid_len,),
        in_specs=[
            pl.BlockSpec((rows, C), lambda i: (i, 0)),             # x rows (bf16)
            pl.BlockSpec((C, 3 * C), lambda i: (0, 0)),            # W_qkv (bf16, q-scaled)
            pl.BlockSpec((1, 3 * C), lambda i: (0, 0)),            # qkv bias (f32)
            pl.BlockSpec((num_heads, N, N), lambda i: (0, 0, 0)),  # rel-pos bias (f32)
            pl.BlockSpec((nW, N, N), lambda i: (0, 0, 0)),         # shift mask, NOT tiled
            pl.BlockSpec((C, C), lambda i: (0, 0)),                # W_proj (bf16)
            pl.BlockSpec((1, C), lambda i: (0, 0)),                # proj bias (f32)
        ],
        out_specs=pl.BlockSpec((rows, C), lambda i: (i, 0)),
        scratch_shapes=[pltpu.VMEM((rows, C), jnp.bfloat16)],      # staged head outputs
        compiler_params=pltpu.CompilerParams(
            dimension_semantics=("parallel",),                     # independent windows
            vmem_limit_bytes=vmem_limit),
    )(x_flat, p["w_qkv_bf"], p["qkv_bias_full"], rpb, mask,
      p["w_proj_bf"], p["b_proj_2d"])
    return out.reshape(B_, N, C)


# ----------------------------- pure-JAX reference ----------------------------
def window_attention_reference(x, mask, p, num_heads):
    B_, N, C = x.shape
    hd = C // num_heads
    scale = hd ** -0.5
    hp = jax.lax.Precision.HIGHEST          # scoped to the reference only
    rpb = _rpe_bias(p, N, num_heads)

    qkv_bias = jnp.concatenate([p["q_bias"], jnp.zeros_like(p["v_bias"]),
                                p["v_bias"]])
    qkv = jnp.dot(x, p["w_qkv_t"], precision=hp) + qkv_bias
    qkv = qkv.reshape(B_, N, 3, num_heads, hd).transpose(2, 0, 3, 1, 4)
    q, k, v = qkv[0], qkv[1], qkv[2]
    attn = jnp.einsum("bhnd,bhmd->bhnm", q * scale, k, precision=hp)
    attn = attn + rpb[None]
    if mask is not None:
        nW = mask.shape[0]
        attn = attn.reshape(B_ // nW, nW, num_heads, N, N) + mask[None, :, None]
        attn = attn.reshape(B_, num_heads, N, N)
    attn = jax.nn.softmax(attn, axis=-1)
    out = jnp.einsum("bhnm,bhmd->bhnd", attn, v, precision=hp)
    out = out.transpose(0, 2, 1, 3).reshape(B_, N, C)
    return jnp.dot(out, p["w_proj_t"], precision=hp) + p["b_proj"]


# ----------------------------- main -------------------------------------------
if __name__ == "__main__":
    # Toy shapes: 8x8 feature map, 4x4 windows (N=16), shift=2 -> nW=4 masks;
    # B=2 batches -> B_=8 windows; dim C=32, 4 heads (hd=8), rpe hidden 64.
    H, W, ws, ss = 8, 8, 4, 2
    B, C, nH, rh = 2, 32, 4, 64
    N = ws * ws
    nW = (H // ws) * (W // ws)
    B_ = B * nW

    key = jax.random.PRNGKey(0)
    ks = jax.random.split(key, 12)

    def init(k, shape, scale=0.02):
        return scale * jax.random.normal(k, shape, jnp.float32)

    p = {
        # attention weights stored pre-transposed for `x @ W`
        "w_qkv_t": init(ks[0], (C, 3 * C)),
        "q_bias": init(ks[1], (C,)),
        "v_bias": init(ks[2], (C,)),
        "w_proj_t": init(ks[3], (C, C)),
        "b_proj": init(ks[4], (C,)),
        # log-CPB relative-position MLP (2 -> rh -> nH, 2nd layer bias-free)
        "rpe_w1": init(ks[5], (rh, 2), 0.5),
        "rpe_b1": init(ks[6], (rh,), 0.5),
        "rpe_w2": init(ks[7], (nH, rh), 0.5),
        # buffers
        "rpe_table": jnp.asarray(build_relative_coords_table(ws)),
        "rpi": jnp.asarray(build_relative_position_index(ws)),
    }
    mask = jnp.asarray(build_attn_mask(H, W, ws, ss))          # (nW, N, N)
    x = jax.random.normal(ks[8], (B_, N, C), jnp.float32)      # (B_, N, C)

    kp = dict(p)
    kp.update(prepare_attention_params(p, nH))                 # one-time weight prep

    out = jax.block_until_ready(window_attention(x, mask, kp, nH))
    ref = jax.block_until_ready(window_attention_reference(x, mask, p, nH))

    assert out.shape == (B_, N, C)
    np.testing.assert_allclose(np.asarray(out), np.asarray(ref),
                               rtol=2e-2, atol=2e-3)
    print("KERNEL_OK")
</pallas_src>

<mosaic_0001>
module attributes {stable_mosaic.version = 11 : i64} {
  func.func @_window_attention_kernel(%arg0: i32, %arg1: memref<64x32xbf16, #tpu.memory_space<vmem>>, %arg2: memref<32x96xbf16, #tpu.memory_space<vmem>>, %arg3: memref<1x96xf32, #tpu.memory_space<vmem>>, %arg4: memref<4x16x16xf32, #tpu.memory_space<vmem>>, %arg5: memref<4x16x16xf32, #tpu.memory_space<vmem>>, %arg6: memref<32x32xbf16, #tpu.memory_space<vmem>>, %arg7: memref<1x32xf32, #tpu.memory_space<vmem>>, %arg8: memref<64x32xf32, #tpu.memory_space<vmem>>, %arg9: memref<64x32xbf16, #tpu.memory_space<vmem>>) attributes {dimension_semantics = [#tpu.dimension_semantics<parallel>], iteration_bounds = array<i64: 2>, scalar_prefetch = 0 : i64, scratch_operands = 1 : i64, tpu.core_type = #tpu.core_type<tc>, window_params = [{transform_indices = @transform_0, window_bounds = array<i64: 64, 32>}, {pipeline_mode = #tpu.pipeline_mode<synchronous>, transform_indices = @transform_1, window_bounds = array<i64: 32, 96>}, {pipeline_mode = #tpu.pipeline_mode<synchronous>, transform_indices = @transform_2, window_bounds = array<i64: 1, 96>}, {pipeline_mode = #tpu.pipeline_mode<synchronous>, transform_indices = @transform_3, window_bounds = array<i64: 4, 16, 16>}, {pipeline_mode = #tpu.pipeline_mode<synchronous>, transform_indices = @transform_4, window_bounds = array<i64: 4, 16, 16>}, {pipeline_mode = #tpu.pipeline_mode<synchronous>, transform_indices = @transform_5, window_bounds = array<i64: 32, 32>}, {pipeline_mode = #tpu.pipeline_mode<synchronous>, transform_indices = @transform_6, window_bounds = array<i64: 1, 32>}, {transform_indices = @transform_7, window_bounds = array<i64: 64, 32>}]} {
    %c0 = arith.constant 0 : index
    %c0_0 = arith.constant 0 : index
    %0 = vector.load %arg1[%c0, %c0_0] : memref<64x32xbf16, #tpu.memory_space<vmem>>, vector<64x32xbf16>
    %c0_1 = arith.constant 0 : index
    %c0_2 = arith.constant 0 : index
    %1 = vector.load %arg2[%c0_1, %c0_2] : memref<32x96xbf16, #tpu.memory_space<vmem>>, vector<32x96xbf16>
    %cst = arith.constant dense<0.000000e+00> : vector<64x96xf32>
    %2 = tpu.matmul %0, %1, %cst {dimension_numbers = #tpu.dot_dimension_numbers<[1], [0], [0], [1], [0, 0, 1, 1], [], []>} : vector<64x32xbf16>, vector<32x96xbf16>, vector<64x96xf32> -> vector<64x96xf32>
    %c0_3 = arith.constant 0 : index
    %c0_4 = arith.constant 0 : index
    %3 = vector.load %arg3[%c0_3, %c0_4] : memref<1x96xf32, #tpu.memory_space<vmem>>, vector<1x96xf32>
    %4 = vector.broadcast %3 : vector<1x96xf32> to vector<64x96xf32>
    %5 = arith.addf %2, %4 : vector<64x96xf32>
    %6 = arith.truncf %5 : vector<64x96xf32> to vector<64x96xbf16>
    %c0_5 = arith.constant 0 : index
    %c0_6 = arith.constant 0 : index
    %c0_7 = arith.constant 0 : index
    %7 = vector.load %arg5[%c0_5, %c0_6, %c0_7] : memref<4x16x16xf32, #tpu.memory_space<vmem>>, vector<4x16x16xf32>
    %8 = vector.extract_strided_slice %6 {offsets = [0, 0], sizes = [64, 8], strides = [1, 1]} : vector<64x96xbf16> to vector<64x8xbf16>
    %9 = vector.shape_cast %8 : vector<64x8xbf16> to vector<4x16x8xbf16>
    %10 = vector.extract_strided_slice %6 {offsets = [0, 32], sizes = [64, 8], strides = [1, 1]} : vector<64x96xbf16> to vector<64x8xbf16>
    %11 = vector.shape_cast %10 : vector<64x8xbf16> to vector<4x16x8xbf16>
    %12 = vector.extract_strided_slice %6 {offsets = [0, 64], sizes = [64, 8], strides = [1, 1]} : vector<64x96xbf16> to vector<64x8xbf16>
    %13 = vector.shape_cast %12 : vector<64x8xbf16> to vector<4x16x8xbf16>
    "tpu.trace_start"() <{level = 10 : i32, message = "bnd,bmd->bnm"}> : () -> ()
    %cst_8 = arith.constant dense<0.000000e+00> : vector<4x16x16xf32>
    %14 = tpu.matmul %9, %11, %cst_8 {dimension_numbers = #tpu.dot_dimension_numbers<[2], [2], [1], [1], [0, 0, 0, 1, 1, 1], [0], [0]>} : vector<4x16x8xbf16>, vector<4x16x8xbf16>, vector<4x16x16xf32> -> vector<4x16x16xf32>
    "tpu.trace_stop"() : () -> ()
    %c0_9 = arith.constant 0 : index
    %c0_10 = arith.constant 0 : index
    %c0_11 = arith.constant 0 : index
    %15 = vector.load %arg4[%c0_9, %c0_10, %c0_11] : memref<4x16x16xf32, #tpu.memory_space<vmem>>, vector<1x16x16xf32>
    %16 = vector.shape_cast %15 : vector<1x16x16xf32> to vector<16x16xf32>
    %17 = vector.shape_cast %16 : vector<16x16xf32> to vector<1x16x16xf32>
    %18 = vector.broadcast %17 : vector<1x16x16xf32> to vector<4x16x16xf32>
    %19 = arith.addf %18, %7 : vector<4x16x16xf32>
    %20 = vector.shape_cast %14 : vector<4x16x16xf32> to vector<1x4x16x16xf32>
    %21 = vector.shape_cast %19 : vector<4x16x16xf32> to vector<1x4x16x16xf32>
    %22 = arith.addf %20, %21 : vector<1x4x16x16xf32>
    %23 = vector.shape_cast %22 : vector<1x4x16x16xf32> to vector<4x16x16xf32>
    %cst_12 = arith.constant dense<0xFF800000> : vector<4x16xf32>
    %24 = vector.multi_reduction <maximumf>, %23, %cst_12 [2] : vector<4x16x16xf32> to vector<4x16xf32>
    %25 = vector.shape_cast %24 : vector<4x16xf32> to vector<4x16x1xf32>
    %26 = vector.broadcast %25 : vector<4x16x1xf32> to vector<4x16x16xf32>
    %27 = arith.subf %23, %26 : vector<4x16x16xf32>
    %28 = math.exp %27 : vector<4x16x16xf32>
    %cst_13 = arith.constant dense<0.000000e+00> : vector<4x16xf32>
    %29 = vector.multi_reduction <add>, %28, %cst_13 [2] : vector<4x16x16xf32> to vector<4x16xf32>
    %30 = vector.shape_cast %29 : vector<4x16xf32> to vector<4x16x1xf32>
    %31 = tpu.reciprocal %30 {approx = true} : vector<4x16x1xf32> -> vector<4x16x1xf32>
    %32 = vector.broadcast %31 : vector<4x16x1xf32> to vector<4x16x16xf32>
    %33 = arith.mulf %28, %32 : vector<4x16x16xf32>
    %34 = arith.truncf %33 : vector<4x16x16xf32> to vector<4x16x16xbf16>
    "tpu.trace_start"() <{level = 10 : i32, message = "bnm,bmd->bnd"}> : () -> ()
    %cst_14 = arith.constant dense<0.000000e+00> : vector<4x16x8xf32>
    %35 = tpu.matmul %34, %13, %cst_14 {dimension_numbers = #tpu.dot_dimension_numbers<[2], [1], [1], [2], [0, 0, 0, 1, 1, 2], [0], [0]>} : vector<4x16x16xbf16>, vector<4x16x8xbf16>, vector<4x16x8xf32> -> vector<4x16x8xf32>
    "tpu.trace_stop"() : () -> ()
    %36 = vector.shape_cast %35 : vector<4x16x8xf32> to vector<64x8xf32>
    %37 = arith.truncf %36 : vector<64x8xf32> to vector<64x8xbf16>
    %c0_15 = arith.constant 0 : index
    %c0_16 = arith.constant 0 : index
    %38 = vector.load %arg9[%c0_15, %c0_16] : memref<64x32xbf16, #tpu.memory_space<vmem>>, vector<64x8xbf16>
    tpu.vector_store %arg9[%c0_15, %c0_16], %37 {strides = array<i32>} : memref<64x32xbf16, #tpu.memory_space<vmem>>, vector<64x8xbf16>,
    %39 = vector.extract_strided_slice %6 {offsets = [0, 8], sizes = [64, 8], strides = [1, 1]} : vector<64x96xbf16> to vector<64x8xbf16>
    %40 = vector.shape_cast %39 : vector<64x8xbf16> to vector<4x16x8xbf16>
    %41 = vector.extract_strided_slice %6 {offsets = [0, 40], sizes = [64, 8], strides = [1, 1]} : vector<64x96xbf16> to vector<64x8xbf16>
    %42 = vector.shape_cast %41 : vector<64x8xbf16> to vector<4x16x8xbf16>
    %43 = vector.extract_strided_slice %6 {offsets = [0, 72], sizes = [64, 8], strides = [1, 1]} : vector<64x96xbf16> to vector<64x8xbf16>
    %44 = vector.shape_cast %43 : vector<64x8xbf16> to vector<4x16x8xbf16>
    "tpu.trace_start"() <{level = 10 : i32, message = "bnd,bmd->bnm"}> : () -> ()
    %cst_17 = arith.constant dense<0.000000e+00> : vector<4x16x16xf32>
    %45 = tpu.matmul %40, %42, %cst_17 {dimension_numbers = #tpu.dot_dimension_numbers<[2], [2], [1], [1], [0, 0, 0, 1, 1, 1], [0], [0]>} : vector<4x16x8xbf16>, vector<4x16x8xbf16>, vector<4x16x16xf32> -> vector<4x16x16xf32>
    "tpu.trace_stop"() : () -> ()
    %c1 = arith.constant 1 : index
    %c0_18 = arith.constant 0 : index
    %c0_19 = arith.constant 0 : index
    %46 = vector.load %arg4[%c1, %c0_18, %c0_19] : memref<4x16x16xf32, #tpu.memory_space<vmem>>, vector<1x16x16xf32>
    %47 = vector.shape_cast %46 : vector<1x16x16xf32> to vector<16x16xf32>
    %48 = vector.shape_cast %47 : vector<16x16xf32> to vector<1x16x16xf32>
    %49 = vector.broadcast %48 : vector<1x16x16xf32> to vector<4x16x16xf32>
    %50 = arith.addf %49, %7 : vector<4x16x16xf32>
    %51 = vector.shape_cast %45 : vector<4x16x16xf32> to vector<1x4x16x16xf32>
    %52 = vector.shape_cast %50 : vector<4x16x16xf32> to vector<1x4x16x16xf32>
    %53 = arith.addf %51, %52 : vector<1x4x16x16xf32>
    %54 = vector.shape_cast %53 : vector<1x4x16x16xf32> to vector<4x16x16xf32>
    %cst_20 = arith.constant dense<0xFF800000> : vector<4x16xf32>
    %55 = vector.multi_reduction <maximumf>, %54, %cst_20 [2] : vector<4x16x16xf32> to vector<4x16xf32>
    %56 = vector.shape_cast %55 : vector<4x16xf32> to vector<4x16x1xf32>
    %57 = vector.broadcast %56 : vector<4x16x1xf32> to vector<4x16x16xf32>
    %58 = arith.subf %54, %57 : vector<4x16x16xf32>
    %59 = math.exp %58 : vector<4x16x16xf32>
    %cst_21 = arith.constant dense<0.000000e+00> : vector<4x16xf32>
    %60 = vector.multi_reduction <add>, %59, %cst_21 [2] : vector<4x16x16xf32> to vector<4x16xf32>
    %61 = vector.shape_cast %60 : vector<4x16xf32> to vector<4x16x1xf32>
    %62 = tpu.reciprocal %61 {approx = true} : vector<4x16x1xf32> -> vector<4x16x1xf32>
    %63 = vector.broadcast %62 : vector<4x16x1xf32> to vector<4x16x16xf32>
    %64 = arith.mulf %59, %63 : vector<4x16x16xf32>
    %65 = arith.truncf %64 : vector<4x16x16xf32> to vector<4x16x16xbf16>
    "tpu.trace_start"() <{level = 10 : i32, message = "bnm,bmd->bnd"}> : () -> ()
    %cst_22 = arith.constant dense<0.000000e+00> : vector<4x16x8xf32>
    %66 = tpu.matmul %65, %44, %cst_22 {dimension_numbers = #tpu.dot_dimension_numbers<[2], [1], [1], [2], [0, 0, 0, 1, 1, 2], [0], [0]>} : vector<4x16x16xbf16>, vector<4x16x8xbf16>, vector<4x16x8xf32> -> vector<4x16x8xf32>
    "tpu.trace_stop"() : () -> ()
    %67 = vector.shape_cast %66 : vector<4x16x8xf32> to vector<64x8xf32>
    %68 = arith.truncf %67 : vector<64x8xf32> to vector<64x8xbf16>
    %c0_23 = arith.constant 0 : index
    %c8 = arith.constant 8 : index
    %69 = vector.load %arg9[%c0_23, %c8] : memref<64x32xbf16, #tpu.memory_space<vmem>>, vector<64x8xbf16>
    tpu.vector_store %arg9[%c0_23, %c8], %68 {strides = array<i32>} : memref<64x32xbf16, #tpu.memory_space<vmem>>, vector<64x8xbf16>,
    %70 = vector.extract_strided_slice %6 {offsets = [0, 16], sizes = [64, 8], strides = [1, 1]} : vector<64x96xbf16> to vector<64x8xbf16>
    %71 = vector.shape_cast %70 : vector<64x8xbf16> to vector<4x16x8xbf16>
    %72 = vector.extract_strided_slice %6 {offsets = [0, 48], sizes = [64, 8], strides = [1, 1]} : vector<64x96xbf16> to vector<64x8xbf16>
    %73 = vector.shape_cast %72 : vector<64x8xbf16> to vector<4x16x8xbf16>
    %74 = vector.extract_strided_slice %6 {offsets = [0, 80], sizes = [64, 8], strides = [1, 1]} : vector<64x96xbf16> to vector<64x8xbf16>
    %75 = vector.shape_cast %74 : vector<64x8xbf16> to vector<4x16x8xbf16>
    "tpu.trace_start"() <{level = 10 : i32, message = "bnd,bmd->bnm"}> : () -> ()
    %cst_24 = arith.constant dense<0.000000e+00> : vector<4x16x16xf32>
    %76 = tpu.matmul %71, %73, %cst_24 {dimension_numbers = #tpu.dot_dimension_numbers<[2], [2], [1], [1], [0, 0, 0, 1, 1, 1], [0], [0]>} : vector<4x16x8xbf16>, vector<4x16x8xbf16>, vector<4x16x16xf32> -> vector<4x16x16xf32>
    "tpu.trace_stop"() : () -> ()
    %c2 = arith.constant 2 : index
    %c0_25 = arith.constant 0 : index
    %c0_26 = arith.constant 0 : index
    %77 = vector.load %arg4[%c2, %c0_25, %c0_26] : memref<4x16x16xf32, #tpu.memory_space<vmem>>, vector<1x16x16xf32>
    %78 = vector.shape_cast %77 : vector<1x16x16xf32> to vector<16x16xf32>
    %79 = vector.shape_cast %78 : vector<16x16xf32> to vector<1x16x16xf32>
    %80 = vector.broadcast %79 : vector<1x16x16xf32> to vector<4x16x16xf32>
    %81 = arith.addf %80, %7 : vector<4x16x16xf32>
    %82 = vector.shape_cast %76 : vector<4x16x16xf32> to vector<1x4x16x16xf32>
    %83 = vector.shape_cast %81 : vector<4x16x16xf32> to vector<1x4x16x16xf32>
    %84 = arith.addf %82, %83 : vector<1x4x16x16xf32>
    %85 = vector.shape_cast %84 : vector<1x4x16x16xf32> to vector<4x16x16xf32>
    %cst_27 = arith.constant dense<0xFF800000> : vector<4x16xf32>
    %86 = vector.multi_reduction <maximumf>, %85, %cst_27 [2] : vector<4x16x16xf32> to vector<4x16xf32>
    %87 = vector.shape_cast %86 : vector<4x16xf32> to vector<4x16x1xf32>
    %88 = vector.broadcast %87 : vector<4x16x1xf32> to vector<4x16x16xf32>
    %89 = arith.subf %85, %88 : vector<4x16x16xf32>
    %90 = math.exp %89 : vector<4x16x16xf32>
    %cst_28 = arith.constant dense<0.000000e+00> : vector<4x16xf32>
    %91 = vector.multi_reduction <add>, %90, %cst_28 [2] : vector<4x16x16xf32> to vector<4x16xf32>
    %92 = vector.shape_cast %91 : vector<4x16xf32> to vector<4x16x1xf32>
    %93 = tpu.reciprocal %92 {approx = true} : vector<4x16x1xf32> -> vector<4x16x1xf32>
    %94 = vector.broadcast %93 : vector<4x16x1xf32> to vector<4x16x16xf32>
    %95 = arith.mulf %90, %94 : vector<4x16x16xf32>
    %96 = arith.truncf %95 : vector<4x16x16xf32> to vector<4x16x16xbf16>
    "tpu.trace_start"() <{level = 10 : i32, message = "bnm,bmd->bnd"}> : () -> ()
    %cst_29 = arith.constant dense<0.000000e+00> : vector<4x16x8xf32>
    %97 = tpu.matmul %96, %75, %cst_29 {dimension_numbers = #tpu.dot_dimension_numbers<[2], [1], [1], [2], [0, 0, 0, 1, 1, 2], [0], [0]>} : vector<4x16x16xbf16>, vector<4x16x8xbf16>, vector<4x16x8xf32> -> vector<4x16x8xf32>
    "tpu.trace_stop"() : () -> ()
    %98 = vector.shape_cast %97 : vector<4x16x8xf32> to vector<64x8xf32>
    %99 = arith.truncf %98 : vector<64x8xf32> to vector<64x8xbf16>
    %c0_30 = arith.constant 0 : index
    %c16 = arith.constant 16 : index
    %100 = vector.load %arg9[%c0_30, %c16] : memref<64x32xbf16, #tpu.memory_space<vmem>>, vector<64x8xbf16>
    tpu.vector_store %arg9[%c0_30, %c16], %99 {strides = array<i32>} : memref<64x32xbf16, #tpu.memory_space<vmem>>, vector<64x8xbf16>,
    %101 = vector.extract_strided_slice %6 {offsets = [0, 24], sizes = [64, 8], strides = [1, 1]} : vector<64x96xbf16> to vector<64x8xbf16>
    %102 = vector.shape_cast %101 : vector<64x8xbf16> to vector<4x16x8xbf16>
    %103 = vector.extract_strided_slice %6 {offsets = [0, 56], sizes = [64, 8], strides = [1, 1]} : vector<64x96xbf16> to vector<64x8xbf16>
    %104 = vector.shape_cast %103 : vector<64x8xbf16> to vector<4x16x8xbf16>
    %105 = vector.extract_strided_slice %6 {offsets = [0, 88], sizes = [64, 8], strides = [1, 1]} : vector<64x96xbf16> to vector<64x8xbf16>
    %106 = vector.shape_cast %105 : vector<64x8xbf16> to vector<4x16x8xbf16>
    "tpu.trace_start"() <{level = 10 : i32, message = "bnd,bmd->bnm"}> : () -> ()
    %cst_31 = arith.constant dense<0.000000e+00> : vector<4x16x16xf32>
    %107 = tpu.matmul %102, %104, %cst_31 {dimension_numbers = #tpu.dot_dimension_numbers<[2], [2], [1], [1], [0, 0, 0, 1, 1, 1], [0], [0]>} : vector<4x16x8xbf16>, vector<4x16x8xbf16>, vector<4x16x16xf32> -> vector<4x16x16xf32>
    "tpu.trace_stop"() : () -> ()
    %c3 = arith.constant 3 : index
    %c0_32 = arith.constant 0 : index
    %c0_33 = arith.constant 0 : index
    %108 = vector.load %arg4[%c3, %c0_32, %c0_33] : memref<4x16x16xf32, #tpu.memory_space<vmem>>, vector<1x16x16xf32>
    %109 = vector.shape_cast %108 : vector<1x16x16xf32> to vector<16x16xf32>
    %110 = vector.shape_cast %109 : vector<16x16xf32> to vector<1x16x16xf32>
    %111 = vector.broadcast %110 : vector<1x16x16xf32> to vector<4x16x16xf32>
    %112 = arith.addf %111, %7 : vector<4x16x16xf32>
    %113 = vector.shape_cast %107 : vector<4x16x16xf32> to vector<1x4x16x16xf32>
    %114 = vector.shape_cast %112 : vector<4x16x16xf32> to vector<1x4x16x16xf32>
    %115 = arith.addf %113, %114 : vector<1x4x16x16xf32>
    %116 = vector.shape_cast %115 : vector<1x4x16x16xf32> to vector<4x16x16xf32>
    %cst_34 = arith.constant dense<0xFF800000> : vector<4x16xf32>
    %117 = vector.multi_reduction <maximumf>, %116, %cst_34 [2] : vector<4x16x16xf32> to vector<4x16xf32>
    %118 = vector.shape_cast %117 : vector<4x16xf32> to vector<4x16x1xf32>
    %119 = vector.broadcast %118 : vector<4x16x1xf32> to vector<4x16x16xf32>
    %120 = arith.subf %116, %119 : vector<4x16x16xf32>
    %121 = math.exp %120 : vector<4x16x16xf32>
    %cst_35 = arith.constant dense<0.000000e+00> : vector<4x16xf32>
    %122 = vector.multi_reduction <add>, %121, %cst_35 [2] : vector<4x16x16xf32> to vector<4x16xf32>
    %123 = vector.shape_cast %122 : vector<4x16xf32> to vector<4x16x1xf32>
    %124 = tpu.reciprocal %123 {approx = true} : vector<4x16x1xf32> -> vector<4x16x1xf32>
    %125 = vector.broadcast %124 : vector<4x16x1xf32> to vector<4x16x16xf32>
    %126 = arith.mulf %121, %125 : vector<4x16x16xf32>
    %127 = arith.truncf %126 : vector<4x16x16xf32> to vector<4x16x16xbf16>
    "tpu.trace_start"() <{level = 10 : i32, message = "bnm,bmd->bnd"}> : () -> ()
    %cst_36 = arith.constant dense<0.000000e+00> : vector<4x16x8xf32>
    %128 = tpu.matmul %127, %106, %cst_36 {dimension_numbers = #tpu.dot_dimension_numbers<[2], [1], [1], [2], [0, 0, 0, 1, 1, 2], [0], [0]>} : vector<4x16x16xbf16>, vector<4x16x8xbf16>, vector<4x16x8xf32> -> vector<4x16x8xf32>
    "tpu.trace_stop"() : () -> ()
    %129 = vector.shape_cast %128 : vector<4x16x8xf32> to vector<64x8xf32>
    %130 = arith.truncf %129 : vector<64x8xf32> to vector<64x8xbf16>
    %c0_37 = arith.constant 0 : index
    %c24 = arith.constant 24 : index
    %131 = vector.load %arg9[%c0_37, %c24] : memref<64x32xbf16, #tpu.memory_space<vmem>>, vector<64x8xbf16>
    tpu.vector_store %arg9[%c0_37, %c24], %130 {strides = array<i32>} : memref<64x32xbf16, #tpu.memory_space<vmem>>, vector<64x8xbf16>,
    %c0_38 = arith.constant 0 : index
    %c0_39 = arith.constant 0 : index
    %132 = vector.load %arg9[%c0_38, %c0_39] : memref<64x32xbf16, #tpu.memory_space<vmem>>, vector<64x32xbf16>
    %c0_40 = arith.constant 0 : index
    %c0_41 = arith.constant 0 : index
    %133 = vector.load %arg6[%c0_40, %c0_41] : memref<32x32xbf16, #tpu.memory_space<vmem>>, vector<32x32xbf16>
    %cst_42 = arith.constant dense<0.000000e+00> : vector<64x32xf32>
    %134 = tpu.matmul %132, %133, %cst_42 {dimension_numbers = #tpu.dot_dimension_numbers<[1], [0], [0], [1], [0, 0, 1, 1], [], []>} : vector<64x32xbf16>, vector<32x32xbf16>, vector<64x32xf32> -> vector<64x32xf32>
    %c0_43 = arith.constant 0 : index
    %c0_44 = arith.constant 0 : index
    %135 = vector.load %arg7[%c0_43, %c0_44] : memref<1x32xf32, #tpu.memory_space<vmem>>, vector<1x32xf32>
    %136 = vector.broadcast %135 : vector<1x32xf32> to vector<64x32xf32>
    %137 = arith.addf %134, %136 : vector<64x32xf32>
    %c0_45 = arith.constant 0 : index
    %c0_46 = arith.constant 0 : index
    %138 = vector.load %arg8[%c0_45, %c0_46] : memref<64x32xf32, #tpu.memory_space<vmem>>, vector<64x32xf32>
    tpu.vector_store %arg8[%c0_45, %c0_46], %137 {strides = array<i32>} : memref<64x32xf32, #tpu.memory_space<vmem>>, vector<64x32xf32>,
    return
  }
  func.func @transform_0(%arg0: i32) -> (i32, i32) {
    %c0_i32 = arith.constant 0 : i32
    %c0_i32_0 = arith.constant 0 : i32
    return %arg0, %c0_i32 : i32, i32
  }
  func.func @transform_1(%arg0: i32) -> (i32, i32) {
    %c0_i32 = arith.constant 0 : i32
    %c0_i32_0 = arith.constant 0 : i32
    %c0_i32_1 = arith.constant 0 : i32
    return %c0_i32, %c0_i32_0 : i32, i32
  }
  func.func @transform_2(%arg0: i32) -> (i32, i32) {
    %c0_i32 = arith.constant 0 : i32
    %c0_i32_0 = arith.constant 0 : i32
    %c0_i32_1 = arith.constant 0 : i32
    return %c0_i32, %c0_i32_0 : i32, i32
  }
  func.func @transform_3(%arg0: i32) -> (i32, i32, i32) {
    %c0_i32 = arith.constant 0 : i32
    %c0_i32_0 = arith.constant 0 : i32
    %c0_i32_1 = arith.constant 0 : i32
    %c0_i32_2 = arith.constant 0 : i32
    return %c0_i32, %c0_i32_0, %c0_i32_1 : i32, i32, i32
  }
  func.func @transform_4(%arg0: i32) -> (i32, i32, i32) {
    %c0_i32 = arith.constant 0 : i32
    %c0_i32_0 = arith.constant 0 : i32
    %c0_i32_1 = arith.constant 0 : i32
    %c0_i32_2 = arith.constant 0 : i32
    return %c0_i32, %c0_i32_0, %c0_i32_1 : i32, i32, i32
  }
  func.func @transform_5(%arg0: i32) -> (i32, i32) {
    %c0_i32 = arith.constant 0 : i32
    %c0_i32_0 = arith.constant 0 : i32
    %c0_i32_1 = arith.constant 0 : i32
    return %c0_i32, %c0_i32_0 : i32, i32
  }
  func.func @transform_6(%arg0: i32) -> (i32, i32) {
    %c0_i32 = arith.constant 0 : i32
    %c0_i32_0 = arith.constant 0 : i32
    %c0_i32_1 = arith.constant 0 : i32
    return %c0_i32, %c0_i32_0 : i32, i32
  }
  func.func @transform_7(%arg0: i32) -> (i32, i32) {
    %c0_i32 = arith.constant 0 : i32
    %c0_i32_0 = arith.constant 0 : i32
    return %arg0, %c0_i32 : i32, i32
  }
}

</mosaic_0001>

<llo_original>
// kernel: tpu_custom_call.1
$region0: #{tpu_custom_call.1}
  #allocation0 [shape = 'u32[]', space=smem, size = 0x4, offset = 0x4, fixed_abs, tag = 'smem constant byte address 0x4 - core index']
  #allocation1 [shape = 'u32[144,128]{1,0:T(1,128)}', space=vmem, size = 0x12000, scoped, tag = 'internal scratch']
  #allocation2 [shape = 'bf16[64,32]{1,0:T(16,128)(2,1)}', space=vmem, size = 0x4000, scoped, tag = 'scratch operand']
  %s0 = inlined_call_operand.vmem [shape: bf16[128,32], index: 0, kind: input, shape index: {}]
  %s1 = inlined_call_operand.vmem [shape: bf16[32,96], index: 1, kind: input, shape index: {}]
  %s2 = inlined_call_operand.vmem [shape: f32[1,96], index: 2, kind: input, shape index: {}]
  %s3 = inlined_call_operand.vmem [shape: f32[4,16,16], index: 3, kind: input, shape index: {}]
  %s4 = inlined_call_operand.hbm [shape: f32[4,16,16], index: 4, kind: input, shape index: {}]
  %s5 = inlined_call_operand.vmem [shape: bf16[32,32], index: 5, kind: input, shape index: {}]
  %s6 = inlined_call_operand.vmem [shape: f32[1,32], index: 6, kind: input, shape index: {}]
  %s7 = inlined_call_operand.vmem [shape: f32[128,32], index: 7, kind: output, shape index: {}]
  %s8 = sld [smem:[#allocation0]]
  $region65: #{tpu_custom_call.1} parent=0
    _
  %s10 = ssub.s32 1, %s8
  %s11 = scalar_select 0, %s10, %s8
  $region1: #{tpu_custom_call.1} parent=0
    #allocation3 [shape = 'u8[32768]{0}', space=vmem, size = 0x8000, scoped, tag = 'input window, operand 4, single buffered']
    #allocation4 [shape = 's32[2]{0}', space=sflag, size = 0x8, scoped, tag = 'scoped memory for tpu_custom_call.1']
    %12 = vsyncpa [#allocation4], 0
    loop: start=0, step=1, limit=4
    $region2: #{tpu_custom_call.1} parent=1 // loop_pre_header
      _
    $region3: #{tpu_custom_call.1} parent=1 // loop_header
      %s14 = sphi 0, %s18
      %p15 = scmp.ge.s32.totalorder %s14, 4
      %s24 = sphi 0, %s26
      %s27 = sphi 0, %s24
      %s28 = sphi 0, %s27
      %s44 = sphi 0, %s28
      %s48 = sphi 0, %s48
      %s50 = sphi 0, %s48
      %s51 = sphi 0, %s50
      %s65 = sphi 0, %s51
      %s69 = sphi 0, %s69
      %s71 = sphi 0, %s69
      %s72 = sphi 0, %s71
      %s86 = sphi 0, %s72
      %s90 = sphi 0, %s90
      %s92 = sphi 0, %s90
      %s93 = sphi 0, %s92
      %s107 = sphi 0, %s93
      %s111 = sphi 0, %s111
      %s113 = sphi 0, %s111
      %s114 = sphi 0, %s113
      %s128 = sphi 0, %s114
      %s132 = sphi 0, %s132
      %s134 = sphi 0, %s132
      %s135 = sphi 0, %s134
      %s149 = sphi 0, %s135
      %s153 = sphi 0, %s153
      %s155 = sphi 0, %s153
      %s156 = sphi 0, %s155
      %s170 = sphi 0, %s156
      %s176 = sphi 0, %s178
      %s179 = sphi 0, %s176
      %s180 = sphi 0, %s179
      %s196 = sphi 0, %s180
    $region4: #{tpu_custom_call.1} parent=1 // loop_header_branch
      %17 = sbr.rel (%p15) target = $region8
    $region5: #{tpu_custom_call.1} parent=1 // loop_body
      %s19 = ssub.s32 %s14, 1
      %s20 = ssub.s32 %s14, 2
      %s21 = sadd.s32 %s14, 1
      %s22 = ssub.s32 %s14, %s21
      %p23 = scmp.eq.s32.totalorder %s22, 0
      %s25 = sadd.s32 %s24, 1
      %s26 = scalar_select %p23, %s24, %s25
      %p29 = pneg %p23
      %p30 = scmp.eq.s32.totalorder %s14, 1
      %p31 = por %p29, %p30
      %p32 = scmp.ne.s32.totalorder %s24, %s27
      %p33 = scmp.eq.s32.totalorder %s14, 0
      %p34 = por %p32, %p33
      %p35 = scmp.ne.s32.totalorder %s24, %s27
      %p36 = scmp.eq.s32.totalorder %s19, 1
      %p37 = por %p35, %p36
      %p38 = scmp.ne.s32.totalorder %s27, %s28
      %p39 = scmp.eq.s32.totalorder %s19, 0
      %p40 = por %p38, %p39
      %p41 = scmp.ne.s32.totalorder %s27, %s28
      %p42 = scmp.eq.s32.totalorder %s20, 1
      %p43 = por %p41, %p42
      %p45 = scmp.ne.s32.totalorder %s28, %s44
      %p46 = scmp.eq.s32.totalorder %s20, 0
      %p47 = por %p45, %p46
      %s49 = sadd.s32 %s48, 1
      %p52 = scmp.eq.s32.totalorder %s14, 1
      %p53 = scmp.ne.s32.totalorder %s48, %s50
      %p54 = scmp.eq.s32.totalorder %s14, 0
      %p55 = por %p53, %p54
      %p56 = scmp.ne.s32.totalorder %s48, %s50
      %p57 = scmp.eq.s32.totalorder %s19, 1
      %p58 = por %p56, %p57
      %p59 = scmp.ne.s32.totalorder %s50, %s51
      %p60 = scmp.eq.s32.totalorder %s19, 0
      %p61 = por %p59, %p60
      %p62 = scmp.ne.s32.totalorder %s50, %s51
      %p63 = scmp.eq.s32.totalorder %s20, 1
      %p64 = por %p62, %p63
      %p66 = scmp.ne.s32.totalorder %s51, %s65
      %p67 = scmp.eq.s32.totalorder %s20, 0
      %p68 = por %p66, %p67
      %s70 = sadd.s32 %s69, 1
      %p73 = scmp.eq.s32.totalorder %s14, 1
      %p74 = scmp.ne.s32.totalorder %s69, %s71
      %p75 = scmp.eq.s32.totalorder %s14, 0
      %p76 = por %p74, %p75
      %p77 = scmp.ne.s32.totalorder %s69, %s71
      %p78 = scmp.eq.s32.totalorder %s19, 1
      %p79 = por %p77, %p78
      %p80 = scmp.ne.s32.totalorder %s71, %s72
      %p81 = scmp.eq.s32.totalorder %s19, 0
      %p82 = por %p80, %p81
      %p83 = scmp.ne.s32.totalorder %s71, %s72
      %p84 = scmp.eq.s32.totalorder %s20, 1
      %p85 = por %p83, %p84
      %p87 = scmp.ne.s32.totalorder %s72, %s86
      %p88 = scmp.eq.s32.totalorder %s20, 0
      %p89 = por %p87, %p88
      %s91 = sadd.s32 %s90, 1
      %p94 = scmp.eq.s32.totalorder %s14, 1
      %p95 = scmp.ne.s32.totalorder %s90, %s92
      %p96 = scmp.eq.s32.totalorder %s14, 0
      %p97 = por %p95, %p96
      %p98 = scmp.ne.s32.totalorder %s90, %s92
      %p99 = scmp.eq.s32.totalorder %s19, 1
      %p100 = por %p98, %p99
      %p101 = scmp.ne.s32.totalorder %s92, %s93
      %p102 = scmp.eq.s32.totalorder %s19, 0
      %p103 = por %p101, %p102
      %p104 = scmp.ne.s32.totalorder %s92, %s93
      %p105 = scmp.eq.s32.totalorder %s20, 1
      %p106 = por %p104, %p105
      %p108 = scmp.ne.s32.totalorder %s93, %s107
      %p109 = scmp.eq.s32.totalorder %s20, 0
      %p110 = por %p108, %p109
      %s112 = sadd.s32 %s111, 1
      %p115 = scmp.eq.s32.totalorder %s14, 1
      %p116 = scmp.ne.s32.totalorder %s111, %s113
      %p117 = scmp.eq.s32.totalorder %s14, 0
      %p118 = por %p116, %p117
      %p119 = scmp.ne.s32.totalorder %s111, %s113
      %p120 = scmp.eq.s32.totalorder %s19, 1
      %p121 = por %p119, %p120
      %p122 = scmp.ne.s32.totalorder %s113, %s114
      %p123 = scmp.eq.s32.totalorder %s19, 0
      %p124 = por %p122, %p123
      %p125 = scmp.ne.s32.totalorder %s113, %s114
      %p126 = scmp.eq.s32.totalorder %s20, 1
      %p127 = por %p125, %p126
      %p129 = scmp.ne.s32.totalorder %s114, %s128
      %p130 = scmp.eq.s32.totalorder %s20, 0
      %p131 = por %p129, %p130
      %s133 = sadd.s32 %s132, 1
      %p136 = scmp.eq.s32.totalorder %s14, 1
      %p137 = scmp.ne.s32.totalorder %s132, %s134
      %p138 = scmp.eq.s32.totalorder %s14, 0
      %p139 = por %p137, %p138
      %p140 = scmp.ne.s32.totalorder %s132, %s134
      %p141 = scmp.eq.s32.totalorder %s19, 1
      %p142 = por %p140, %p141
      %p143 = scmp.ne.s32.totalorder %s134, %s135
      %p144 = scmp.eq.s32.totalorder %s19, 0
      %p145 = por %p143, %p144
      %p146 = scmp.ne.s32.totalorder %s134, %s135
      %p147 = scmp.eq.s32.totalorder %s20, 1
      %p148 = por %p146, %p147
      %p150 = scmp.ne.s32.totalorder %s135, %s149
      %p151 = scmp.eq.s32.totalorder %s20, 0
      %p152 = por %p150, %p151
      %s154 = sadd.s32 %s153, 1
      %p157 = scmp.eq.s32.totalorder %s14, 1
      %p158 = scmp.ne.s32.totalorder %s153, %s155
      %p159 = scmp.eq.s32.totalorder %s14, 0
      %p160 = por %p158, %p159
      %p161 = scmp.ne.s32.totalorder %s153, %s155
      %p162 = scmp.eq.s32.totalorder %s19, 1
      %p163 = por %p161, %p162
      %p164 = scmp.ne.s32.totalorder %s155, %s156
      %p165 = scmp.eq.s32.totalorder %s19, 0
      %p166 = por %p164, %p165
      %p167 = scmp.ne.s32.totalorder %s155, %s156
      %p168 = scmp.eq.s32.totalorder %s20, 1
      %p169 = por %p167, %p168
      %p171 = scmp.ne.s32.totalorder %s156, %s170
      %p172 = scmp.eq.s32.totalorder %s20, 0
      %p173 = por %p171, %p172
      %s174 = ssub.s32 %s14, %s21
      %p175 = scmp.eq.s32.totalorder %s174, 0
      %s177 = sadd.s32 %s176, 1
      %s178 = scalar_select %p175, %s176, %s177
      %p181 = pneg %p175
      %p182 = scmp.eq.s32.totalorder %s14, 1
      %p183 = por %p181, %p182
      %p184 = scmp.ne.s32.totalorder %s176, %s179
      %p185 = scmp.eq.s32.totalorder %s14, 0
      %p186 = por %p184, %p185
      %p187 = scmp.ne.s32.totalorder %s176, %s179
      %p188 = scmp.eq.s32.totalorder %s19, 1
      %p189 = por %p187, %p188
      %p190 = scmp.ne.s32.totalorder %s179, %s180
      %p191 = scmp.eq.s32.totalorder %s19, 0
      %p192 = por %p190, %p191
      %p193 = scmp.ne.s32.totalorder %s179, %s180
      %p194 = scmp.eq.s32.totalorder %s20, 1
      %p195 = por %p193, %p194
      %p197 = scmp.ne.s32.totalorder %s180, %s196
      %p198 = scmp.eq.s32.totalorder %s20, 0
      %p199 = por %p197, %p198
      %p200 = scmp.le.s32.totalorder 1, %s14
      %p201 = scmp.lt.s32.totalorder %s14, 3
      %p202 = pnand %p200, %p201
      %p203 = pneg %p202
      // Predicated region
      $region9: #{tpu_custom_call.1} parent=5 // pred_check
        _
      $region10: #{tpu_custom_call.1} parent=5 // pred_check_branch
        %205 = sbr.rel (%p202) target = $region12
      $region11: #{tpu_custom_call.1} parent=5 // pred_region
        %s206 = ssub.s32 %s14, 1
        // Predicated region
        $region13: #{tpu_custom_call.1} parent=11 // pred_check
          %p207 = pneg %p61
        $region14: #{tpu_custom_call.1} parent=11 // pred_check_branch
          %209 = sbr.rel (%p207) target = $region16
        $region15: #{tpu_custom_call.1} parent=11 // pred_region
          _
        $region16: #{tpu_custom_call.1} parent=11 // pred_fallthru
          _
        // Predicated region
        $region17: #{tpu_custom_call.1} parent=11 // pred_check
          %p210 = pneg %p82
        $region18: #{tpu_custom_call.1} parent=11 // pred_check_branch
          %212 = sbr.rel (%p210) target = $region20
        $region19: #{tpu_custom_call.1} parent=11 // pred_region
          _
        $region20: #{tpu_custom_call.1} parent=11 // pred_fallthru
          _
        // Predicated region
        $region21: #{tpu_custom_call.1} parent=11 // pred_check
          %p213 = pneg %p103
        $region22: #{tpu_custom_call.1} parent=11 // pred_check_branch
          %215 = sbr.rel (%p213) target = $region24
        $region23: #{tpu_custom_call.1} parent=11 // pred_region
          _
        $region24: #{tpu_custom_call.1} parent=11 // pred_fallthru
          _
        // Predicated region
        $region25: #{tpu_custom_call.1} parent=11 // pred_check
          %p216 = pneg %p124
        $region26: #{tpu_custom_call.1} parent=11 // pred_check_branch
          %218 = sbr.rel (%p216) target = $region28
        $region27: #{tpu_custom_call.1} parent=11 // pred_region
          %s220 = ssub.s32 1024, 1024
          %221 = vsyncadd [#allocation4], %s220
          %s222 = sshll.u32 [#allocation3], 4
          %s223 = int_to_ptr.vmem [resolvable:$true] %s222
          %228 = dma.hbm_to_vmem [thread:$0]  %s4, 1024, %s223, [#allocation4], 128, 128, 8
        $region28: #{tpu_custom_call.1} parent=11 // pred_fallthru
          _
        // Predicated region
        $region29: #{tpu_custom_call.1} parent=11 // pred_check
          %p229 = pneg %p145
        $region30: #{tpu_custom_call.1} parent=11 // pred_check_branch
          %231 = sbr.rel (%p229) target = $region32
        $region31: #{tpu_custom_call.1} parent=11 // pred_region
          _
        $region32: #{tpu_custom_call.1} parent=11 // pred_fallthru
          _
        // Predicated region
        $region33: #{tpu_custom_call.1} parent=11 // pred_check
          %p232 = pneg %p166
        $region34: #{tpu_custom_call.1} parent=11 // pred_check_branch
          %234 = sbr.rel (%p232) target = $region36
        $region35: #{tpu_custom_call.1} parent=11 // pred_region
          _
        $region36: #{tpu_custom_call.1} parent=11 // pred_fallthru
          _
      $region12: #{tpu_custom_call.1} parent=5 // pred_fallthru
        _
      %p235 = scmp.lt.s32.totalorder %s14, 2
      // Predicated region
      $region37: #{tpu_custom_call.1} parent=5 // pred_check
        %p236 = pneg %p235
      $region38: #{tpu_custom_call.1} parent=5 // pred_check_branch
        %238 = sbr.rel (%p236) target = $region40
      $region39: #{tpu_custom_call.1} parent=5 // pred_region
        // Predicated region
        $region41: #{tpu_custom_call.1} parent=39 // pred_check
          %p239 = pneg %p34
        $region42: #{tpu_custom_call.1} parent=39 // pred_check_branch
          %241 = sbr.rel (%p239) target = $region44
        $region43: #{tpu_custom_call.1} parent=39 // pred_region
          %s242 = smul.u32 8, %s14
          %p243 = scmp.lt.s32.totalorder %s242, 15
          %s244 = scalar_select %p243, %s242, 15
          %s245 = smul.addr %s244, 4
          %s246 = scalar_lea.vmem %s0, %s245
          %s247 = smul.u32 8, %s14
        $region44: #{tpu_custom_call.1} parent=39 // pred_fallthru
          _
      $region40: #{tpu_custom_call.1} parent=5 // pred_fallthru
        _
      %p248 = scmp.le.s32.totalorder 1, %s14
      %p249 = scmp.lt.s32.totalorder %s14, 3
      %p250 = pnand %p248, %p249
      %p251 = pneg %p250
      // Predicated region
      $region45: #{tpu_custom_call.1} parent=5 // pred_check
        _
      $region46: #{tpu_custom_call.1} parent=5 // pred_check_branch
        %253 = sbr.rel (%p250) target = $region48
      $region47: #{tpu_custom_call.1} parent=5 // pred_region
        %s254 = ssub.s32 %s14, 1
        // Predicated region
        $region49: #{tpu_custom_call.1} parent=47 // pred_check
          %p255 = pneg %p124
        $region50: #{tpu_custom_call.1} parent=47 // pred_check_branch
          %257 = sbr.rel (%p255) target = $region52
        $region51: #{tpu_custom_call.1} parent=47 // pred_region
          %258 = dma.done [#allocation4], 1024
        $region52: #{tpu_custom_call.1} parent=47 // pred_fallthru
          _
        %s259 = smul.u32 8, %s19
        %p260 = scmp.lt.s32.totalorder %s259, 15
        %s261 = scalar_select %p260, %s259, 15
        %s262 = smul.addr %s261, 4
        %s263 = scalar_lea.vmem %s0, %s262
        %p264 = pneg %p40
        %p265 = pneg %p37
        %p266 = pneg %p61
        %p267 = pneg %p58
        %p268 = pneg %p82
        %p269 = pneg %p79
        %p270 = pneg %p103
        %p271 = pneg %p100
        %p272 = pneg %p124
        %p273 = pneg %p121
        %p274 = pneg %p145
        %p275 = pneg %p142
        %p276 = pneg %p166
        %p277 = pneg %p163
        %p278 = pneg %p192
        %p279 = pneg %p189
        %s280 = smul.u32 8, %s19
        %p281 = scmp.lt.s32.totalorder %s280, 15
        %s282 = scalar_select %p281, %s280, 15
        %s283 = smul.addr %s282, 8
        %s284 = scalar_lea.vmem %s7, %s283
        %s285 = smul.u32 8, %s19
        %p286 = scmp.lt.s32.totalorder %s285, 15
        %s287 = scalar_select %p286, %s285, 15
        %s288 = smul.addr %s287, 4
        %s289 = scalar_lea.vmem %s0, %s288
        %s290 = smul.u32 8, %s19
        %s291 = smul.u32 8, %s19
        %p292 = scmp.lt.s32.totalorder %s291, 15
        %s293 = scalar_select %p292, %s291, 15
        %s294 = smul.addr %s293, 8
        %s295 = scalar_lea.vmem %s7, %s294
        %s296 = smul.u32 8, %s19
        %v298 = vld [vmem:[%s289] sm:$0xf]
        %v299 = vld [vmem:[%s289 + $0x4] sm:$0xf]
        %v300 = vld [vmem:[%s289 + $0x8] sm:$0xf]
        %v301 = vld [vmem:[%s289 + $0xc] sm:$0xf]
        %v302 = vld [vmem:[%s289 + $0x10] sm:$0xf]
        %v303 = vld [vmem:[%s289 + $0x14] sm:$0xf]
        %v304 = vld [vmem:[%s289 + $0x18] sm:$0xf]
        %v305 = vld [vmem:[%s289 + $0x1c] sm:$0xf]
        %v306 = vld [vmem:[%s1] sm:$0xf]
        %v307 = vld [vmem:[%s1 + $0x4] sm:$0xf]
        %v308 = vld [vmem:[%s1 + $0x8] sm:$0xf]
        %v309 = vld [vmem:[%s1 + $0xc] sm:$0xf]
        %v310 = vld [vmem:[%s2] sm:$0x1]
        %v312 = vlaneseq
        %v313 = vshrl.u32 %v312, 7
        %v314 = vsub.s32 0, %v313
        %v315 = vrot.slane %v310, %v314
        %v325 = vunpack.c.l.b16 %v298
        %v326 = vunpack.c.l.b16 %v299
        %v327 = vunpack.c.l.b16 %v300
        %v328 = vunpack.c.l.b16 %v301
        %v329 = vunpack.c.l.b16 %v302
        %v330 = vunpack.c.l.b16 %v303
        %v331 = vunpack.c.l.b16 %v304
        %v332 = vunpack.c.l.b16 %v305
        %v333 = vpack.c.b16 %v326, %v325
        %v334 = vpack.c.b16 %v328, %v327
        %v335 = vpack.c.b16 %v330, %v329
        %v336 = vpack.c.b16 %v332, %v331
        %v341 = vunpack.c.l.b16 %v306
        %v342 = vunpack.c.l.b16 %v307
        %v343 = vunpack.c.l.b16 %v308
        %v344 = vunpack.c.l.b16 %v309
        %v345 = vpack.c.b16 %v342, %v341
        %v346 = vpack.c.b16 %v344, %v343
        %vm349 = vcmask 261120
        %v351 = vsel %vm349, %v333, 0
        %v354 = vsel %vm349, %v334, 0
        %v357 = vsel %vm349, %v335, 0
        %v360 = vsel %vm349, %v336, 0
        %362 = vmatprep.subr.bf16.mxu0 0
        %363 = vmatpush1.bf16.msra.mxu0 %v345
        %364 = vmatprep.subr.bf16.mxu0 0
        %365 = vmatpush1.bf16.msra.mxu0 %v346
        %366 = vmatprep.subr.bf16.mxu0 0
        %367 = vmatpush1.bf16.msra.mxu0 0
        %368 = vmatprep.subr.bf16.mxu0 0
        %369 = vmatpush1.bf16.msra.mxu0 0
        %370 = vmatprep.subr.bf16.mxu0 0
        %371 = vmatpush1.bf16.msra.mxu0 0
        %372 = vmatprep.subr.bf16.mxu0 0
        %373 = vmatpush1.bf16.msra.mxu0 0
        %374 = vmatprep.subr.bf16.mxu0 0
        %375 = vmatpush1.bf16.msra.mxu0 0
        %376 = vmatprep.subr.bf16.mxu0 0
        %377 = vmatpush1.bf16.msra.mxu0 0
        %378 = vmatprep.subr.bf16.mxu0 0
        %379 = vmatpush1.bf16.msra.mxu0 0
        %380 = vmatprep.subr.bf16.mxu0 0
        %381 = vmatpush1.bf16.msra.mxu0 0
        %382 = vmatprep.subr.bf16.mxu0 0
        %383 = vmatpush1.bf16.msra.mxu0 0
        %384 = vmatprep.subr.bf16.mxu0 0
        %385 = vmatpush1.bf16.msra.mxu0 0
        %386 = vmatprep.subr.bf16.mxu0 0
        %387 = vmatpush1.bf16.msra.mxu0 0
        %388 = vmatprep.subr.bf16.mxu0 0
        %389 = vmatpush1.bf16.msra.mxu0 0
        %390 = vmatprep.subr.bf16.mxu0 0
        %391 = vmatpush1.bf16.msra.mxu0 0
        %392 = vmatprep.subr.bf16.mxu0 0
        %393 = vmatpush1.bf16.msra.mxu0 0
        %394 = vmatprep.mubr.bf16.mxu0 0
        %395 = vmatmul.mubr.bf16.gmra.mrb[0].mxu0 %v351
        %v396 = vpop.f32.mrb[0].mxu0
        %v397 = vadd.f32 %v315, %v396
        %v398 = vpop.f32.mrb[0].mxu0
        %v399 = vpop.f32.mrb[0].mxu0
        %v400 = vadd.f32 %v315, %v399
        %v401 = vpop.f32.mrb[0].mxu0
        %402 = vmatprep.mubr.bf16.mxu0 0
        %403 = vmatmul.mubr.bf16.gmra.mrb[0].mxu0 %v354
        %v404 = vpop.f32.mrb[0].mxu0
        %v405 = vadd.f32 %v315, %v404
        %v406 = vpop.f32.mrb[0].mxu0
        %v407 = vpop.f32.mrb[0].mxu0
        %v408 = vadd.f32 %v315, %v407
        %v409 = vpop.f32.mrb[0].mxu0
        %410 = vmatprep.mubr.bf16.mxu0 0
        %411 = vmatmul.mubr.bf16.gmra.mrb[0].mxu0 %v357
        %v412 = vpop.f32.mrb[0].mxu0
        %v413 = vadd.f32 %v315, %v412
        %v414 = vpop.f32.mrb[0].mxu0
        %v415 = vpop.f32.mrb[0].mxu0
        %v416 = vadd.f32 %v315, %v415
        %v417 = vpop.f32.mrb[0].mxu0
        %418 = vmatprep.mubr.bf16.mxu0 0
        %419 = vmatmul.mubr.bf16.gmra.mrb[0].mxu0 %v360
        %v420 = vpop.f32.mrb[0].mxu0
        %v421 = vadd.f32 %v315, %v420
        %v422 = vpop.f32.mrb[0].mxu0
        %v423 = vpop.f32.mrb[0].mxu0
        %v424 = vadd.f32 %v315, %v423
        %v425 = vpop.f32.mrb[0].mxu0
        %426 = vdwg.mxu0
        %v427 = vpack.c.bf16 %v400, %v397
        %v428 = vpack.c.bf16 %v408, %v405
        %v429 = vpack.c.bf16 %v416, %v413
        %v430 = vpack.c.bf16 %v424, %v421
        %v431 = vld [vmem:[#allocation3] sm:$0xff]
        %v432 = vld [vmem:[#allocation3 + $0x8] sm:$0xff]
        %v433 = vld [vmem:[#allocation3 + $0x10] sm:$0xff]
        %v434 = vld [vmem:[#allocation3 + $0x18] sm:$0xff]
        %v435 = vld [vmem:[#allocation3 + $0x20] sm:$0xff]
        %v436 = vld [vmem:[#allocation3 + $0x28] sm:$0xff]
        %v437 = vld [vmem:[#allocation3 + $0x30] sm:$0xff]
        %v438 = vld [vmem:[#allocation3 + $0x38] sm:$0xff]
        %440 = vrot.lane.b32.xlu0 %v427, 96
        %v441 = vpop.permute.xlu0 %440
        %vm442 = vcmask 64512
        %v444 = vsel %vm442, %v427, 0
        %v447 = vsel %vm442, %v441, 0
        %449 = vmatprep.subr.bf16.mxu0 0
        %450 = vmatpush1.bf16.xpose.msra.mxu0 %v447
        %451 = vmatprep.subr.bf16.mxu0 0
        %452 = vmatpush1.bf16.xpose.msra.mxu0 0
        %453 = vmatprep.subr.bf16.mxu0 0
        %454 = vmatpush1.bf16.xpose.msra.mxu0 0
        %455 = vmatprep.subr.bf16.mxu0 0
        %456 = vmatpush1.bf16.xpose.msra.mxu0 0
        %457 = vmatprep.subr.bf16.mxu0 0
        %458 = vmatpush1.bf16.xpose.msra.mxu0 0
        %459 = vmatprep.subr.bf16.mxu0 0
        %460 = vmatpush1.bf16.xpose.msra.mxu0 0
        %461 = vmatprep.subr.bf16.mxu0 0
        %462 = vmatpush1.bf16.xpose.msra.mxu0 0
        %463 = vmatprep.subr.bf16.mxu0 0
        %464 = vmatpush1.bf16.xpose.msra.mxu0 0
        %465 = vmatprep.subr.bf16.mxu0 0
        %466 = vmatpush1.bf16.xpose.msra.mxu0 0
        %467 = vmatprep.subr.bf16.mxu0 0
        %468 = vmatpush1.bf16.xpose.msra.mxu0 0
        %469 = vmatprep.subr.bf16.mxu0 0
        %470 = vmatpush1.bf16.xpose.msra.mxu0 0
        %471 = vmatprep.subr.bf16.mxu0 0
        %472 = vmatpush1.bf16.xpose.msra.mxu0 0
        %473 = vmatprep.subr.bf16.mxu0 0
        %474 = vmatpush1.bf16.xpose.msra.mxu0 0
        %475 = vmatprep.subr.bf16.mxu0 0
        %476 = vmatpush1.bf16.xpose.msra.mxu0 0
        %477 = vmatprep.subr.bf16.mxu0 0
        %478 = vmatpush1.bf16.xpose.msra.mxu0 0
        %479 = vmatprep.subr.bf16.mxu0 0
        %480 = vmatpush1.bf16.xpose.msra.mxu0 0
        %481 = vmatprep.mubr.bf16.mxu0 0
        %482 = vmatmul.mubr.bf16.gmra.mrb[0].mxu0 %v444
        %v483 = vpop.f32.mrb[0].mxu0
        %v484 = vadd.f32 0.0, %v483
        %v485 = vpop.f32.mrb[0].mxu0
        %v486 = vpop.f32.mrb[0].mxu0
        %v487 = vadd.f32 0.0, %v486
        %v488 = vpop.f32.mrb[0].mxu0
        %489 = vdwg.mxu0
        %491 = vrot.lane.b32.xlu0 %v428, 96
        %v492 = vpop.permute.xlu0 %491
        %v494 = vsel %vm442, %v428, 0
        %v497 = vsel %vm442, %v492, 0
        %499 = vmatprep.subr.bf16.mxu0 0
        %500 = vmatpush1.bf16.xpose.msra.mxu0 %v497
        %501 = vmatprep.subr.bf16.mxu0 0
        %502 = vmatpush1.bf16.xpose.msra.mxu0 0
        %503 = vmatprep.subr.bf16.mxu0 0
        %504 = vmatpush1.bf16.xpose.msra.mxu0 0
        %505 = vmatprep.subr.bf16.mxu0 0
        %506 = vmatpush1.bf16.xpose.msra.mxu0 0
        %507 = vmatprep.subr.bf16.mxu0 0
        %508 = vmatpush1.bf16.xpose.msra.mxu0 0
        %509 = vmatprep.subr.bf16.mxu0 0
        %510 = vmatpush1.bf16.xpose.msra.mxu0 0
        %511 = vmatprep.subr.bf16.mxu0 0
        %512 = vmatpush1.bf16.xpose.msra.mxu0 0
        %513 = vmatprep.subr.bf16.mxu0 0
        %514 = vmatpush1.bf16.xpose.msra.mxu0 0
        %515 = vmatprep.subr.bf16.mxu0 0
        %516 = vmatpush1.bf16.xpose.msra.mxu0 0
        %517 = vmatprep.subr.bf16.mxu0 0
        %518 = vmatpush1.bf16.xpose.msra.mxu0 0
        %519 = vmatprep.subr.bf16.mxu0 0
        %520 = vmatpush1.bf16.xpose.msra.mxu0 0
        %521 = vmatprep.subr.bf16.mxu0 0
        %522 = vmatpush1.bf16.xpose.msra.mxu0 0
        %523 = vmatprep.subr.bf16.mxu0 0
        %524 = vmatpush1.bf16.xpose.msra.mxu0 0
        %525 = vmatprep.subr.bf16.mxu0 0
        %526 = vmatpush1.bf16.xpose.msra.mxu0 0
        %527 = vmatprep.subr.bf16.mxu0 0
        %528 = vmatpush1.bf16.xpose.msra.mxu0 0
        %529 = vmatprep.subr.bf16.mxu0 0
        %530 = vmatpush1.bf16.xpose.msra.mxu0 0
        %531 = vmatprep.mubr.bf16.mxu0 0
        %532 = vmatmul.mubr.bf16.gmra.mrb[0].mxu0 %v494
        %v533 = vpop.f32.mrb[0].mxu0
        %v534 = vadd.f32 0.0, %v533
        %v535 = vpop.f32.mrb[0].mxu0
        %v536 = vpop.f32.mrb[0].mxu0
        %v537 = vadd.f32 0.0, %v536
        %v538 = vpop.f32.mrb[0].mxu0
        %539 = vdwg.mxu0
        %541 = vrot.lane.b32.xlu0 %v429, 96
        %v542 = vpop.permute.xlu0 %541
        %v544 = vsel %vm442, %v429, 0
        %v547 = vsel %vm442, %v542, 0
        %549 = vmatprep.subr.bf16.mxu0 0
        %550 = vmatpush1.bf16.xpose.msra.mxu0 %v547
        %551 = vmatprep.subr.bf16.mxu0 0
        %552 = vmatpush1.bf16.xpose.msra.mxu0 0
        %553 = vmatprep.subr.bf16.mxu0 0
        %554 = vmatpush1.bf16.xpose.msra.mxu0 0
        %555 = vmatprep.subr.bf16.mxu0 0
        %556 = vmatpush1.bf16.xpose.msra.mxu0 0
        %557 = vmatprep.subr.bf16.mxu0 0
        %558 = vmatpush1.bf16.xpose.msra.mxu0 0
        %559 = vmatprep.subr.bf16.mxu0 0
        %560 = vmatpush1.bf16.xpose.msra.mxu0 0
        %561 = vmatprep.subr.bf16.mxu0 0
        %562 = vmatpush1.bf16.xpose.msra.mxu0 0
        %563 = vmatprep.subr.bf16.mxu0 0
        %564 = vmatpush1.bf16.xpose.msra.mxu0 0
        %565 = vmatprep.subr.bf16.mxu0 0
        %566 = vmatpush1.bf16.xpose.msra.mxu0 0
        %567 = vmatprep.subr.bf16.mxu0 0
        %568 = vmatpush1.bf16.xpose.msra.mxu0 0
        %569 = vmatprep.subr.bf16.mxu0 0
        %570 = vmatpush1.bf16.xpose.msra.mxu0 0
        %571 = vmatprep.subr.bf16.mxu0 0
        %572 = vmatpush1.bf16.xpose.msra.mxu0 0
        %573 = vmatprep.subr.bf16.mxu0 0
        %574 = vmatpush1.bf16.xpose.msra.mxu0 0
        %575 = vmatprep.subr.bf16.mxu0 0
        %576 = vmatpush1.bf16.xpose.msra.mxu0 0
        %577 = vmatprep.subr.bf16.mxu0 0
        %578 = vmatpush1.bf16.xpose.msra.mxu0 0
        %579 = vmatprep.subr.bf16.mxu0 0
        %580 = vmatpush1.bf16.xpose.msra.mxu0 0
        %581 = vmatprep.mubr.bf16.mxu0 0
        %582 = vmatmul.mubr.bf16.gmra.mrb[0].mxu0 %v544
        %v583 = vpop.f32.mrb[0].mxu0
        %v584 = vadd.f32 0.0, %v583
        %v585 = vpop.f32.mrb[0].mxu0
        %v586 = vpop.f32.mrb[0].mxu0
        %v587 = vadd.f32 0.0, %v586
        %v588 = vpop.f32.mrb[0].mxu0
        %589 = vdwg.mxu0
        %591 = vrot.lane.b32.xlu0 %v430, 96
        %v592 = vpop.permute.xlu0 %591
        %v594 = vsel %vm442, %v430, 0
        %v597 = vsel %vm442, %v592, 0
        %599 = vmatprep.subr.bf16.mxu0 0
        %600 = vmatpush1.bf16.xpose.msra.mxu0 %v597
        %601 = vmatprep.subr.bf16.mxu0 0
        %602 = vmatpush1.bf16.xpose.msra.mxu0 0
        %603 = vmatprep.subr.bf16.mxu0 0
        %604 = vmatpush1.bf16.xpose.msra.mxu0 0
        %605 = vmatprep.subr.bf16.mxu0 0
        %606 = vmatpush1.bf16.xpose.msra.mxu0 0
        %607 = vmatprep.subr.bf16.mxu0 0
        %608 = vmatpush1.bf16.xpose.msra.mxu0 0
        %609 = vmatprep.subr.bf16.mxu0 0
        %610 = vmatpush1.bf16.xpose.msra.mxu0 0
        %611 = vmatprep.subr.bf16.mxu0 0
        %612 = vmatpush1.bf16.xpose.msra.mxu0 0
        %613 = vmatprep.subr.bf16.mxu0 0
        %614 = vmatpush1.bf16.xpose.msra.mxu0 0
        %615 = vmatprep.subr.bf16.mxu0 0
        %616 = vmatpush1.bf16.xpose.msra.mxu0 0
        %617 = vmatprep.subr.bf16.mxu0 0
        %618 = vmatpush1.bf16.xpose.msra.mxu0 0
        %619 = vmatprep.subr.bf16.mxu0 0
        %620 = vmatpush1.bf16.xpose.msra.mxu0 0
        %621 = vmatprep.subr.bf16.mxu0 0
        %622 = vmatpush1.bf16.xpose.msra.mxu0 0
        %623 = vmatprep.subr.bf16.mxu0 0
        %624 = vmatpush1.bf16.xpose.msra.mxu0 0
        %625 = vmatprep.subr.bf16.mxu0 0
        %626 = vmatpush1.bf16.xpose.msra.mxu0 0
        %627 = vmatprep.subr.bf16.mxu0 0
        %628 = vmatpush1.bf16.xpose.msra.mxu0 0
        %629 = vmatprep.subr.bf16.mxu0 0
        %630 = vmatpush1.bf16.xpose.msra.mxu0 0
        %631 = vmatprep.mubr.bf16.mxu0 0
        %632 = vmatmul.mubr.bf16.gmra.mrb[0].mxu0 %v594
        %v633 = vpop.f32.mrb[0].mxu0
        %v634 = vadd.f32 0.0, %v633
        %v635 = vpop.f32.mrb[0].mxu0
        %v636 = vpop.f32.mrb[0].mxu0
        %v637 = vadd.f32 0.0, %v636
        %v638 = vpop.f32.mrb[0].mxu0
        %639 = vdwg.mxu0
        %v640 = vld [vmem:[%s3] sm:$0xff]
        %v641 = vld [vmem:[%s3 + $0x8] sm:$0xff]
        %v642 = vadd.f32 %v640, %v431
        %v643 = vadd.f32 %v641, %v432
        %v644 = vadd.f32 %v640, %v433
        %v645 = vadd.f32 %v641, %v434
        %v646 = vadd.f32 %v640, %v435
        %v647 = vadd.f32 %v641, %v436
        %v648 = vadd.f32 %v640, %v437
        %v649 = vadd.f32 %v641, %v438
        %v650 = vadd.f32 %v484, %v642
        %v651 = vadd.f32 %v487, %v643
        %v652 = vadd.f32 %v534, %v644
        %v653 = vadd.f32 %v537, %v645
        %v654 = vadd.f32 %v584, %v646
        %v655 = vadd.f32 %v587, %v647
        %v656 = vadd.f32 %v634, %v648
        %v657 = vadd.f32 %v637, %v649
        %vm658 = vcmask 130048
        %v659 = vsel %vm658, %v650, -inf
        %660 = vmax.xlane.f32.xlu0 %v659
        %v661 = vpop.xlane.xlu0 %660
        %v662 = vsel %vm658, %v651, -inf
        %663 = vmax.xlane.f32.xlu0 %v662
        %v664 = vpop.xlane.xlu0 %663
        %v665 = vsel %vm658, %v652, -inf
        %666 = vmax.xlane.f32.xlu0 %v665
        %v667 = vpop.xlane.xlu0 %666
        %v668 = vsel %vm658, %v653, -inf
        %669 = vmax.xlane.f32.xlu0 %v668
        %v670 = vpop.xlane.xlu0 %669
        %v671 = vsel %vm658, %v654, -inf
        %672 = vmax.xlane.f32.xlu0 %v671
        %v673 = vpop.xlane.xlu0 %672
        %v674 = vsel %vm658, %v655, -inf
        %675 = vmax.xlane.f32.xlu0 %v674
        %v676 = vpop.xlane.xlu0 %675
        %v677 = vsel %vm658, %v656, -inf
        %678 = vmax.xlane.f32.xlu0 %v677
        %v679 = vpop.xlane.xlu0 %678
        %v680 = vsel %vm658, %v657, -inf
        %681 = vmax.xlane.f32.xlu0 %v680
        %v682 = vpop.xlane.xlu0 %681
        %v683 = vsub.f32 %v650, %v661
        %v684 = vsub.f32 %v651, %v664
        %v685 = vsub.f32 %v652, %v667
        %v686 = vsub.f32 %v653, %v670
        %v687 = vsub.f32 %v654, %v673
        %v688 = vsub.f32 %v655, %v676
        %v689 = vsub.f32 %v656, %v679
        %v690 = vsub.f32 %v657, %v682
        %v691 = vmul.f32 %v683, 1.442695
        %v692 = vpow.pop %v691
        %v693 = vmul.f32 %v684, 1.442695
        %v694 = vpow.pop %v693
        %v695 = vmul.f32 %v685, 1.442695
        %v696 = vpow.pop %v695
        %v697 = vmul.f32 %v686, 1.442695
        %v698 = vpow.pop %v697
        %v699 = vmul.f32 %v687, 1.442695
        %v700 = vpow.pop %v699
        %v701 = vmul.f32 %v688, 1.442695
        %v702 = vpow.pop %v701
        %v703 = vmul.f32 %v689, 1.442695
        %v704 = vpow.pop %v703
        %v705 = vmul.f32 %v690, 1.442695
        %v706 = vpow.pop %v705
        %v707 = vsel %vm658, %v692, 0.0
        %708 = vadd.xlane.f32.xlu0 %v707
        %v709 = vpop.xlane.xlu0 %708
        %v710 = vsel %vm658, %v694, 0.0
        %711 = vadd.xlane.f32.xlu0 %v710
        %v712 = vpop.xlane.xlu0 %711
        %v713 = vsel %vm658, %v696, 0.0
        %714 = vadd.xlane.f32.xlu0 %v713
        %v715 = vpop.xlane.xlu0 %714
        %v716 = vsel %vm658, %v698, 0.0
        %717 = vadd.xlane.f32.xlu0 %v716
        %v718 = vpop.xlane.xlu0 %717
        %v719 = vsel %vm658, %v700, 0.0
        %720 = vadd.xlane.f32.xlu0 %v719
        %v721 = vpop.xlane.xlu0 %720
        %v722 = vsel %vm658, %v702, 0.0
        %723 = vadd.xlane.f32.xlu0 %v722
        %v724 = vpop.xlane.xlu0 %723
        %v725 = vsel %vm658, %v704, 0.0
        %726 = vadd.xlane.f32.xlu0 %v725
        %v727 = vpop.xlane.xlu0 %726
        %v728 = vsel %vm658, %v706, 0.0
        %729 = vadd.xlane.f32.xlu0 %v728
        %v730 = vpop.xlane.xlu0 %729
        %v731 = vrcp.pop %v709
        %v732 = vrcp.pop %v712
        %v733 = vrcp.pop %v715
        %v734 = vrcp.pop %v718
        %v735 = vrcp.pop %v721
        %v736 = vrcp.pop %v724
        %v737 = vrcp.pop %v727
        %v738 = vrcp.pop %v730
        %v739 = vmul.f32 %v692, %v731
        %v740 = vmul.f32 %v694, %v732
        %v741 = vmul.f32 %v696, %v733
        %v742 = vmul.f32 %v698, %v734
        %v743 = vmul.f32 %v700, %v735
        %v744 = vmul.f32 %v702, %v736
        %v745 = vmul.f32 %v704, %v737
        %v746 = vmul.f32 %v706, %v738
        %v747 = vpack.c.bf16 %v740, %v739
        %v748 = vpack.c.bf16 %v742, %v741
        %v749 = vpack.c.bf16 %v744, %v743
        %v750 = vpack.c.bf16 %v746, %v745
        %751 = vrot.lane.b32.xlu0 %v427, 64
        %v752 = vpop.permute.xlu0 %751
        %v755 = vsel %vm658, %v747, 0
        %757 = vmatprep.subr.bf16.mxu0 0
        %758 = vmatpush1.bf16.msra.mxu0 %v752
        %759 = vmatprep.subr.bf16.mxu0 0
        %760 = vmatpush1.bf16.msra.mxu0 0
        %761 = vmatprep.subr.bf16.mxu0 0
        %762 = vmatpush1.bf16.msra.mxu0 0
        %763 = vmatprep.subr.bf16.mxu0 0
        %764 = vmatpush1.bf16.msra.mxu0 0
        %765 = vmatprep.subr.bf16.mxu0 0
        %766 = vmatpush1.bf16.msra.mxu0 0
        %767 = vmatprep.subr.bf16.mxu0 0
        %768 = vmatpush1.bf16.msra.mxu0 0
        %769 = vmatprep.subr.bf16.mxu0 0
        %770 = vmatpush1.bf16.msra.mxu0 0
        %771 = vmatprep.subr.bf16.mxu0 0
        %772 = vmatpush1.bf16.msra.mxu0 0
        %773 = vmatprep.subr.bf16.mxu0 0
        %774 = vmatpush1.bf16.msra.mxu0 0
        %775 = vmatprep.subr.bf16.mxu0 0
        %776 = vmatpush1.bf16.msra.mxu0 0
        %777 = vmatprep.subr.bf16.mxu0 0
        %778 = vmatpush1.bf16.msra.mxu0 0
        %779 = vmatprep.subr.bf16.mxu0 0
        %780 = vmatpush1.bf16.msra.mxu0 0
        %781 = vmatprep.subr.bf16.mxu0 0
        %782 = vmatpush1.bf16.msra.mxu0 0
        %783 = vmatprep.subr.bf16.mxu0 0
        %784 = vmatpush1.bf16.msra.mxu0 0
        %785 = vmatprep.subr.bf16.mxu0 0
        %786 = vmatpush1.bf16.msra.mxu0 0
        %787 = vmatprep.subr.bf16.mxu0 0
        %788 = vmatpush1.bf16.msra.mxu0 0
        %789 = vmatprep.mubr.bf16.mxu0 0
        %790 = vmatmul.mubr.bf16.gmra.mrb[0].mxu0 %v755
        %v791 = vpop.f32.mrb[0].mxu0
        %v792 = vadd.f32 0.0, %v791
        %v793 = vpop.f32.mrb[0].mxu0
        %v794 = vpop.f32.mrb[0].mxu0
        %v795 = vadd.f32 0.0, %v794
        %v796 = vpop.f32.mrb[0].mxu0
        %797 = vdwg.mxu0
        %798 = vrot.lane.b32.xlu0 %v428, 64
        %v799 = vpop.permute.xlu0 %798
        %v802 = vsel %vm658, %v748, 0
        %804 = vmatprep.subr.bf16.mxu0 0
        %805 = vmatpush1.bf16.msra.mxu0 %v799
        %806 = vmatprep.subr.bf16.mxu0 0
        %807 = vmatpush1.bf16.msra.mxu0 0
        %808 = vmatprep.subr.bf16.mxu0 0
        %809 = vmatpush1.bf16.msra.mxu0 0
        %810 = vmatprep.subr.bf16.mxu0 0
        %811 = vmatpush1.bf16.msra.mxu0 0
        %812 = vmatprep.subr.bf16.mxu0 0
        %813 = vmatpush1.bf16.msra.mxu0 0
        %814 = vmatprep.subr.bf16.mxu0 0
        %815 = vmatpush1.bf16.msra.mxu0 0
        %816 = vmatprep.subr.bf16.mxu0 0
        %817 = vmatpush1.bf16.msra.mxu0 0
        %818 = vmatprep.subr.bf16.mxu0 0
        %819 = vmatpush1.bf16.msra.mxu0 0
        %820 = vmatprep.subr.bf16.mxu0 0
        %821 = vmatpush1.bf16.msra.mxu0 0
        %822 = vmatprep.subr.bf16.mxu0 0
        %823 = vmatpush1.bf16.msra.mxu0 0
        %824 = vmatprep.subr.bf16.mxu0 0
        %825 = vmatpush1.bf16.msra.mxu0 0
        %826 = vmatprep.subr.bf16.mxu0 0
        %827 = vmatpush1.bf16.msra.mxu0 0
        %828 = vmatprep.subr.bf16.mxu0 0
        %829 = vmatpush1.bf16.msra.mxu0 0
        %830 = vmatprep.subr.bf16.mxu0 0
        %831 = vmatpush1.bf16.msra.mxu0 0
        %832 = vmatprep.subr.bf16.mxu0 0
        %833 = vmatpush1.bf16.msra.mxu0 0
        %834 = vmatprep.subr.bf16.mxu0 0
        %835 = vmatpush1.bf16.msra.mxu0 0
        %836 = vmatprep.mubr.bf16.mxu0 0
        %837 = vmatmul.mubr.bf16.gmra.mrb[0].mxu0 %v802
        %v838 = vpop.f32.mrb[0].mxu0
        %v839 = vadd.f32 0.0, %v838
        %v840 = vpop.f32.mrb[0].mxu0
        %v841 = vpop.f32.mrb[0].mxu0
        %v842 = vadd.f32 0.0, %v841
        %v843 = vpop.f32.mrb[0].mxu0
        %844 = vdwg.mxu0
        %845 = vrot.lane.b32.xlu0 %v429, 64
        %v846 = vpop.permute.xlu0 %845
        %v849 = vsel %vm658, %v749, 0
        %851 = vmatprep.subr.bf16.mxu0 0
        %852 = vmatpush1.bf16.msra.mxu0 %v846
        %853 = vmatprep.subr.bf16.mxu0 0
        %854 = vmatpush1.bf16.msra.mxu0 0
        %855 = vmatprep.subr.bf16.mxu0 0
        %856 = vmatpush1.bf16.msra.mxu0 0
        %857 = vmatprep.subr.bf16.mxu0 0
        %858 = vmatpush1.bf16.msra.mxu0 0
        %859 = vmatprep.subr.bf16.mxu0 0
        %860 = vmatpush1.bf16.msra.mxu0 0
        %861 = vmatprep.subr.bf16.mxu0 0
        %862 = vmatpush1.bf16.msra.mxu0 0
        %863 = vmatprep.subr.bf16.mxu0 0
        %864 = vmatpush1.bf16.msra.mxu0 0
        %865 = vmatprep.subr.bf16.mxu0 0
        %866 = vmatpush1.bf16.msra.mxu0 0
        %867 = vmatprep.subr.bf16.mxu0 0
        %868 = vmatpush1.bf16.msra.mxu0 0
        %869 = vmatprep.subr.bf16.mxu0 0
        %870 = vmatpush1.bf16.msra.mxu0 0
        %871 = vmatprep.subr.bf16.mxu0 0
        %872 = vmatpush1.bf16.msra.mxu0 0
        %873 = vmatprep.subr.bf16.mxu0 0
        %874 = vmatpush1.bf16.msra.mxu0 0
        %875 = vmatprep.subr.bf16.mxu0 0
        %876 = vmatpush1.bf16.msra.mxu0 0
        %877 = vmatprep.subr.bf16.mxu0 0
        %878 = vmatpush1.bf16.msra.mxu0 0
        %879 = vmatprep.subr.bf16.mxu0 0
        %880 = vmatpush1.bf16.msra.mxu0 0
        %881 = vmatprep.subr.bf16.mxu0 0
        %882 = vmatpush1.bf16.msra.mxu0 0
        %883 = vmatprep.mubr.bf16.mxu0 0
        %884 = vmatmul.mubr.bf16.gmra.mrb[0].mxu0 %v849
        %v885 = vpop.f32.mrb[0].mxu0
        %v886 = vadd.f32 0.0, %v885
        %v887 = vpop.f32.mrb[0].mxu0
        %v888 = vpop.f32.mrb[0].mxu0
        %v889 = vadd.f32 0.0, %v888
        %v890 = vpop.f32.mrb[0].mxu0
        %891 = vdwg.mxu0
        %892 = vrot.lane.b32.xlu0 %v430, 64
        %v893 = vpop.permute.xlu0 %892
        %v896 = vsel %vm658, %v750, 0
        %898 = vmatprep.subr.bf16.mxu0 0
        %899 = vmatpush1.bf16.msra.mxu0 %v893
        %900 = vmatprep.subr.bf16.mxu0 0
        %901 = vmatpush1.bf16.msra.mxu0 0
        %902 = vmatprep.subr.bf16.mxu0 0
        %903 = vmatpush1.bf16.msra.mxu0 0
        %904 = vmatprep.subr.bf16.mxu0 0
        %905 = vmatpush1.bf16.msra.mxu0 0
        %906 = vmatprep.subr.bf16.mxu0 0
        %907 = vmatpush1.bf16.msra.mxu0 0
        %908 = vmatprep.subr.bf16.mxu0 0
        %909 = vmatpush1.bf16.msra.mxu0 0
        %910 = vmatprep.subr.bf16.mxu0 0
        %911 = vmatpush1.bf16.msra.mxu0 0
        %912 = vmatprep.subr.bf16.mxu0 0
        %913 = vmatpush1.bf16.msra.mxu0 0
        %914 = vmatprep.subr.bf16.mxu0 0
        %915 = vmatpush1.bf16.msra.mxu0 0
        %916 = vmatprep.subr.bf16.mxu0 0
        %917 = vmatpush1.bf16.msra.mxu0 0
        %918 = vmatprep.subr.bf16.mxu0 0
        %919 = vmatpush1.bf16.msra.mxu0 0
        %920 = vmatprep.subr.bf16.mxu0 0
        %921 = vmatpush1.bf16.msra.mxu0 0
        %922 = vmatprep.subr.bf16.mxu0 0
        %923 = vmatpush1.bf16.msra.mxu0 0
        %924 = vmatprep.subr.bf16.mxu0 0
        %925 = vmatpush1.bf16.msra.mxu0 0
        %926 = vmatprep.subr.bf16.mxu0 0
        %927 = vmatpush1.bf16.msra.mxu0 0
        %928 = vmatprep.subr.bf16.mxu0 0
        %929 = vmatpush1.bf16.msra.mxu0 0
        %930 = vmatprep.mubr.bf16.mxu0 0
        %931 = vmatmul.mubr.bf16.gmra.mrb[0].mxu0 %v896
        %v932 = vpop.f32.mrb[0].mxu0
        %v933 = vadd.f32 0.0, %v932
        %v934 = vpop.f32.mrb[0].mxu0
        %v935 = vpop.f32.mrb[0].mxu0
        %v936 = vadd.f32 0.0, %v935
        %v937 = vpop.f32.mrb[0].mxu0
        %938 = vdwg.mxu0
        %v939 = vpack.c.bf16 %v795, %v792
        %v940 = vpack.c.bf16 %v842, %v839
        %v941 = vpack.c.bf16 %v889, %v886
        %v942 = vpack.c.bf16 %v936, %v933
        %943 = vst.msk [vmem:[#allocation2] sm:$0xff] %vm442, %v939
        %944 = vst.msk [vmem:[#allocation2 + $0x8] sm:$0xff] %vm442, %v940
        %945 = vst.msk [vmem:[#allocation2 + $0x10] sm:$0xff] %vm442, %v941
        %946 = vst.msk [vmem:[#allocation2 + $0x18] sm:$0xff] %vm442, %v942
        %947 = vrot.lane.b32.xlu0 %v427, 120
        %v948 = vpop.permute.xlu0 %947
        %949 = vrot.lane.b32.xlu0 %v427, 88
        %v950 = vpop.permute.xlu0 %949
        %v952 = vsel %vm442, %v948, 0
        %v955 = vsel %vm442, %v950, 0
        %957 = vmatprep.subr.bf16.mxu0 0
        %958 = vmatpush1.bf16.xpose.msra.mxu0 %v955
        %959 = vmatprep.subr.bf16.mxu0 0
        %960 = vmatpush1.bf16.xpose.msra.mxu0 0
        %961 = vmatprep.subr.bf16.mxu0 0
        %962 = vmatpush1.bf16.xpose.msra.mxu0 0
        %963 = vmatprep.subr.bf16.mxu0 0
        %964 = vmatpush1.bf16.xpose.msra.mxu0 0
        %965 = vmatprep.subr.bf16.mxu0 0
        %966 = vmatpush1.bf16.xpose.msra.mxu0 0
        %967 = vmatprep.subr.bf16.mxu0 0
        %968 = vmatpush1.bf16.xpose.msra.mxu0 0
        %969 = vmatprep.subr.bf16.mxu0 0
        %970 = vmatpush1.bf16.xpose.msra.mxu0 0
        %971 = vmatprep.subr.bf16.mxu0 0
        %972 = vmatpush1.bf16.xpose.msra.mxu0 0
        %973 = vmatprep.subr.bf16.mxu0 0
        %974 = vmatpush1.bf16.xpose.msra.mxu0 0
        %975 = vmatprep.subr.bf16.mxu0 0
        %976 = vmatpush1.bf16.xpose.msra.mxu0 0
        %977 = vmatprep.subr.bf16.mxu0 0
        %978 = vmatpush1.bf16.xpose.msra.mxu0 0
        %979 = vmatprep.subr.bf16.mxu0 0
        %980 = vmatpush1.bf16.xpose.msra.mxu0 0
        %981 = vmatprep.subr.bf16.mxu0 0
        %982 = vmatpush1.bf16.xpose.msra.mxu0 0
        %983 = vmatprep.subr.bf16.mxu0 0
        %984 = vmatpush1.bf16.xpose.msra.mxu0 0
        %985 = vmatprep.subr.bf16.mxu0 0
        %986 = vmatpush1.bf16.xpose.msra.mxu0 0
        %987 = vmatprep.subr.bf16.mxu0 0
        %988 = vmatpush1.bf16.xpose.msra.mxu0 0
        %989 = vmatprep.mubr.bf16.mxu0 0
        %990 = vmatmul.mubr.bf16.gmra.mrb[0].mxu0 %v952
        %v991 = vpop.f32.mrb[0].mxu0
        %v992 = vadd.f32 0.0, %v991
        %v993 = vpop.f32.mrb[0].mxu0
        %v994 = vpop.f32.mrb[0].mxu0
        %v995 = vadd.f32 0.0, %v994
        %v996 = vpop.f32.mrb[0].mxu0
        %997 = vdwg.mxu0
        %998 = vrot.lane.b32.xlu0 %v428, 120
        %v999 = vpop.permute.xlu0 %998
        %1000 = vrot.lane.b32.xlu0 %v428, 88
        %v1001 = vpop.permute.xlu0 %1000
        %v1003 = vsel %vm442, %v999, 0
        %v1006 = vsel %vm442, %v1001, 0
        %1008 = vmatprep.subr.bf16.mxu0 0
        %1009 = vmatpush1.bf16.xpose.msra.mxu0 %v1006
        %1010 = vmatprep.subr.bf16.mxu0 0
        %1011 = vmatpush1.bf16.xpose.msra.mxu0 0
        %1012 = vmatprep.subr.bf16.mxu0 0
        %1013 = vmatpush1.bf16.xpose.msra.mxu0 0
        %1014 = vmatprep.subr.bf16.mxu0 0
        %1015 = vmatpush1.bf16.xpose.msra.mxu0 0
        %1016 = vmatprep.subr.bf16.mxu0 0
        %1017 = vmatpush1.bf16.xpose.msra.mxu0 0
        %1018 = vmatprep.subr.bf16.mxu0 0
        %1019 = vmatpush1.bf16.xpose.msra.mxu0 0
        %1020 = vmatprep.subr.bf16.mxu0 0
        %1021 = vmatpush1.bf16.xpose.msra.mxu0 0
        %1022 = vmatprep.subr.bf16.mxu0 0
        %1023 = vmatpush1.bf16.xpose.msra.mxu0 0
        %1024 = vmatprep.subr.bf16.mxu0 0
        %1025 = vmatpush1.bf16.xpose.msra.mxu0 0
        %1026 = vmatprep.subr.bf16.mxu0 0
        %1027 = vmatpush1.bf16.xpose.msra.mxu0 0
        %1028 = vmatprep.subr.bf16.mxu0 0
        %1029 = vmatpush1.bf16.xpose.msra.mxu0 0
        %1030 = vmatprep.subr.bf16.mxu0 0
        %1031 = vmatpush1.bf16.xpose.msra.mxu0 0
        %1032 = vmatprep.subr.bf16.mxu0 0
        %1033 = vmatpush1.bf16.xpose.msra.mxu0 0
        %1034 = vmatprep.subr.bf16.mxu0 0
        %1035 = vmatpush1.bf16.xpose.msra.mxu0 0
        %1036 = vmatprep.subr.bf16.mxu0 0
        %1037 = vmatpush1.bf16.xpose.msra.mxu0 0
        %1038 = vmatprep.subr.bf16.mxu0 0
        %1039 = vmatpush1.bf16.xpose.msra.mxu0 0
        %1040 = vmatprep.mubr.bf16.mxu0 0
        %1041 = vmatmul.mubr.bf16.gmra.mrb[0].mxu0 %v1003
        %v1042 = vpop.f32.mrb[0].mxu0
        %v1043 = vadd.f32 0.0, %v1042
        %v1044 = vpop.f32.mrb[0].mxu0
        %v1045 = vpop.f32.mrb[0].mxu0
        %v1046 = vadd.f32 0.0, %v1045
        %v1047 = vpop.f32.mrb[0].mxu0
        %1048 = vdwg.mxu0
        %1049 = vrot.lane.b32.xlu0 %v429, 120
        %v1050 = vpop.permute.xlu0 %1049
        %1051 = vrot.lane.b32.xlu0 %v429, 88
        %v1052 = vpop.permute.xlu0 %1051
        %v1054 = vsel %vm442, %v1050, 0
        %v1057 = vsel %vm442, %v1052, 0
        %1059 = vmatprep.subr.bf16.mxu0 0
        %1060 = vmatpush1.bf16.xpose.msra.mxu0 %v1057
        %1061 = vmatprep.subr.bf16.mxu0 0
        %1062 = vmatpush1.bf16.xpose.msra.mxu0 0
        %1063 = vmatprep.subr.bf16.mxu0 0
        %1064 = vmatpush1.bf16.xpose.msra.mxu0 0
        %1065 = vmatprep.subr.bf16.mxu0 0
        %1066 = vmatpush1.bf16.xpose.msra.mxu0 0
        %1067 = vmatprep.subr.bf16.mxu0 0
        %1068 = vmatpush1.bf16.xpose.msra.mxu0 0
        %1069 = vmatprep.subr.bf16.mxu0 0
        %1070 = vmatpush1.bf16.xpose.msra.mxu0 0
        %1071 = vmatprep.subr.bf16.mxu0 0
        %1072 = vmatpush1.bf16.xpose.msra.mxu0 0
        %1073 = vmatprep.subr.bf16.mxu0 0
        %1074 = vmatpush1.bf16.xpose.msra.mxu0 0
        %1075 = vmatprep.subr.bf16.mxu0 0
        %1076 = vmatpush1.bf16.xpose.msra.mxu0 0
        %1077 = vmatprep.subr.bf16.mxu0 0
        %1078 = vmatpush1.bf16.xpose.msra.mxu0 0
        %1079 = vmatprep.subr.bf16.mxu0 0
        %1080 = vmatpush1.bf16.xpose.msra.mxu0 0
        %1081 = vmatprep.subr.bf16.mxu0 0
        %1082 = vmatpush1.bf16.xpose.msra.mxu0 0
        %1083 = vmatprep.subr.bf16.mxu0 0
        %1084 = vmatpush1.bf16.xpose.msra.mxu0 0
        %1085 = vmatprep.subr.bf16.mxu0 0
        %1086 = vmatpush1.bf16.xpose.msra.mxu0 0
        %1087 = vmatprep.subr.bf16.mxu0 0
        %1088 = vmatpush1.bf16.xpose.msra.mxu0 0
        %1089 = vmatprep.subr.bf16.mxu0 0
        %1090 = vmatpush1.bf16.xpose.msra.mxu0 0
        %1091 = vmatprep.mubr.bf16.mxu0 0
        %1092 = vmatmul.mubr.bf16.gmra.mrb[0].mxu0 %v1054
        %v1093 = vpop.f32.mrb[0].mxu0
        %v1094 = vadd.f32 0.0, %v1093
        %v1095 = vpop.f32.mrb[0].mxu0
        %v1096 = vpop.f32.mrb[0].mxu0
        %v1097 = vadd.f32 0.0, %v1096
        %v1098 = vpop.f32.mrb[0].mxu0
        %1099 = vdwg.mxu0
        %1100 = vrot.lane.b32.xlu0 %v430, 120
        %v1101 = vpop.permute.xlu0 %1100
        %1102 = vrot.lane.b32.xlu0 %v430, 88
        %v1103 = vpop.permute.xlu0 %1102
        %v1105 = vsel %vm442, %v1101, 0
        %v1108 = vsel %vm442, %v1103, 0
        %1110 = vmatprep.subr.bf16.mxu0 0
        %1111 = vmatpush1.bf16.xpose.msra.mxu0 %v1108
        %1112 = vmatprep.subr.bf16.mxu0 0
        %1113 = vmatpush1.bf16.xpose.msra.mxu0 0
        %1114 = vmatprep.subr.bf16.mxu0 0
        %1115 = vmatpush1.bf16.xpose.msra.mxu0 0
        %1116 = vmatprep.subr.bf16.mxu0 0
        %1117 = vmatpush1.bf16.xpose.msra.mxu0 0
        %1118 = vmatprep.subr.bf16.mxu0 0
        %1119 = vmatpush1.bf16.xpose.msra.mxu0 0
        %1120 = vmatprep.subr.bf16.mxu0 0
        %1121 = vmatpush1.bf16.xpose.msra.mxu0 0
        %1122 = vmatprep.subr.bf16.mxu0 0
        %1123 = vmatpush1.bf16.xpose.msra.mxu0 0
        %1124 = vmatprep.subr.bf16.mxu0 0
        %1125 = vmatpush1.bf16.xpose.msra.mxu0 0
        %1126 = vmatprep.subr.bf16.mxu0 0
        %1127 = vmatpush1.bf16.xpose.msra.mxu0 0
        %1128 = vmatprep.subr.bf16.mxu0 0
        %1129 = vmatpush1.bf16.xpose.msra.mxu0 0
        %1130 = vmatprep.subr.bf16.mxu0 0
        %1131 = vmatpush1.bf16.xpose.msra.mxu0 0
        %1132 = vmatprep.subr.bf16.mxu0 0
        %1133 = vmatpush1.bf16.xpose.msra.mxu0 0
        %1134 = vmatprep.subr.bf16.mxu0 0
        %1135 = vmatpush1.bf16.xpose.msra.mxu0 0
        %1136 = vmatprep.subr.bf16.mxu0 0
        %1137 = vmatpush1.bf16.xpose.msra.mxu0 0
        %1138 = vmatprep.subr.bf16.mxu0 0
        %1139 = vmatpush1.bf16.xpose.msra.mxu0 0
        %1140 = vmatprep.subr.bf16.mxu0 0
        %1141 = vmatpush1.bf16.xpose.msra.mxu0 0
        %1142 = vmatprep.mubr.bf16.mxu0 0
        %1143 = vmatmul.mubr.bf16.gmra.mrb[0].mxu0 %v1105
        %v1144 = vpop.f32.mrb[0].mxu0
        %v1145 = vadd.f32 0.0, %v1144
        %v1146 = vpop.f32.mrb[0].mxu0
        %v1147 = vpop.f32.mrb[0].mxu0
        %v1148 = vadd.f32 0.0, %v1147
        %v1149 = vpop.f32.mrb[0].mxu0
        %1150 = vdwg.mxu0
        %s1151 = scalar_lea.vmem %s3, 16
        %v1152 = vld [vmem:[%s1151] sm:$0xff]
        %v1153 = vld [vmem:[%s1151 + $0x8] sm:$0xff]
        %v1154 = vadd.f32 %v1152, %v431
        %v1155 = vadd.f32 %v1153, %v432
        %v1156 = vadd.f32 %v1152, %v433
        %v1157 = vadd.f32 %v1153, %v434
        %v1158 = vadd.f32 %v1152, %v435
        %v1159 = vadd.f32 %v1153, %v436
        %v1160 = vadd.f32 %v1152, %v437
        %v1161 = vadd.f32 %v1153, %v438
        %v1162 = vadd.f32 %v992, %v1154
        %v1163 = vadd.f32 %v995, %v1155
        %v1164 = vadd.f32 %v1043, %v1156
        %v1165 = vadd.f32 %v1046, %v1157
        %v1166 = vadd.f32 %v1094, %v1158
        %v1167 = vadd.f32 %v1097, %v1159
        %v1168 = vadd.f32 %v1145, %v1160
        %v1169 = vadd.f32 %v1148, %v1161
        %v1170 = vsel %vm658, %v1162, -inf
        %1171 = vmax.xlane.f32.xlu0 %v1170
        %v1172 = vpop.xlane.xlu0 %1171
        %v1173 = vsel %vm658, %v1163, -inf
        %1174 = vmax.xlane.f32.xlu0 %v1173
        %v1175 = vpop.xlane.xlu0 %1174
        %v1176 = vsel %vm658, %v1164, -inf
        %1177 = vmax.xlane.f32.xlu0 %v1176
        %v1178 = vpop.xlane.xlu0 %1177
        %v1179 = vsel %vm658, %v1165, -inf
        %1180 = vmax.xlane.f32.xlu0 %v1179
        %v1181 = vpop.xlane.xlu0 %1180
        %v1182 = vsel %vm658, %v1166, -inf
        %1183 = vmax.xlane.f32.xlu0 %v1182
        %v1184 = vpop.xlane.xlu0 %1183
        %v1185 = vsel %vm658, %v1167, -inf
        %1186 = vmax.xlane.f32.xlu0 %v1185
        %v1187 = vpop.xlane.xlu0 %1186
        %v1188 = vsel %vm658, %v1168, -inf
        %1189 = vmax.xlane.f32.xlu0 %v1188
        %v1190 = vpop.xlane.xlu0 %1189
        %v1191 = vsel %vm658, %v1169, -inf
        %1192 = vmax.xlane.f32.xlu0 %v1191
        %v1193 = vpop.xlane.xlu0 %1192
        %v1194 = vsub.f32 %v1162, %v1172
        %v1195 = vsub.f32 %v1163, %v1175
        %v1196 = vsub.f32 %v1164, %v1178
        %v1197 = vsub.f32 %v1165, %v1181
        %v1198 = vsub.f32 %v1166, %v1184
        %v1199 = vsub.f32 %v1167, %v1187
        %v1200 = vsub.f32 %v1168, %v1190
        %v1201 = vsub.f32 %v1169, %v1193
        %v1202 = vmul.f32 %v1194, 1.442695
        %v1203 = vpow.pop %v1202
        %v1204 = vmul.f32 %v1195, 1.442695
        %v1205 = vpow.pop %v1204
        %v1206 = vmul.f32 %v1196, 1.442695
        %v1207 = vpow.pop %v1206
        %v1208 = vmul.f32 %v1197, 1.442695
        %v1209 = vpow.pop %v1208
        %v1210 = vmul.f32 %v1198, 1.442695
        %v1211 = vpow.pop %v1210
        %v1212 = vmul.f32 %v1199, 1.442695
        %v1213 = vpow.pop %v1212
        %v1214 = vmul.f32 %v1200, 1.442695
        %v1215 = vpow.pop %v1214
        %v1216 = vmul.f32 %v1201, 1.442695
        %v1217 = vpow.pop %v1216
        %v1218 = vsel %vm658, %v1203, 0.0
        %1219 = vadd.xlane.f32.xlu0 %v1218
        %v1220 = vpop.xlane.xlu0 %1219
        %v1221 = vsel %vm658, %v1205, 0.0
        %1222 = vadd.xlane.f32.xlu0 %v1221
        %v1223 = vpop.xlane.xlu0 %1222
        %v1224 = vsel %vm658, %v1207, 0.0
        %1225 = vadd.xlane.f32.xlu0 %v1224
        %v1226 = vpop.xlane.xlu0 %1225
        %v1227 = vsel %vm658, %v1209, 0.0
        %1228 = vadd.xlane.f32.xlu0 %v1227
        %v1229 = vpop.xlane.xlu0 %1228
        %v1230 = vsel %vm658, %v1211, 0.0
        %1231 = vadd.xlane.f32.xlu0 %v1230
        %v1232 = vpop.xlane.xlu0 %1231
        %v1233 = vsel %vm658, %v1213, 0.0
        %1234 = vadd.xlane.f32.xlu0 %v1233
        %v1235 = vpop.xlane.xlu0 %1234
        %v1236 = vsel %vm658, %v1215, 0.0
        %1237 = vadd.xlane.f32.xlu0 %v1236
        %v1238 = vpop.xlane.xlu0 %1237
        %v1239 = vsel %vm658, %v1217, 0.0
        %1240 = vadd.xlane.f32.xlu0 %v1239
        %v1241 = vpop.xlane.xlu0 %1240
        %v1242 = vrcp.pop %v1220
        %v1243 = vrcp.pop %v1223
        %v1244 = vrcp.pop %v1226
        %v1245 = vrcp.pop %v1229
        %v1246 = vrcp.pop %v1232
        %v1247 = vrcp.pop %v1235
        %v1248 = vrcp.pop %v1238
        %v1249 = vrcp.pop %v1241
        %v1250 = vmul.f32 %v1203, %v1242
        %v1251 = vmul.f32 %v1205, %v1243
        %v1252 = vmul.f32 %v1207, %v1244
        %v1253 = vmul.f32 %v1209, %v1245
        %v1254 = vmul.f32 %v1211, %v1246
        %v1255 = vmul.f32 %v1213, %v1247
        %v1256 = vmul.f32 %v1215, %v1248
        %v1257 = vmul.f32 %v1217, %v1249
        %v1258 = vpack.c.bf16 %v1251, %v1250
        %v1259 = vpack.c.bf16 %v1253, %v1252
        %v1260 = vpack.c.bf16 %v1255, %v1254
        %v1261 = vpack.c.bf16 %v1257, %v1256
        %1262 = vrot.lane.b32.xlu0 %v427, 56
        %v1263 = vpop.permute.xlu0 %1262
        %v1266 = vsel %vm658, %v1258, 0
        %1268 = vmatprep.subr.bf16.mxu0 0
        %1269 = vmatpush1.bf16.msra.mxu0 %v1263
        %1270 = vmatprep.subr.bf16.mxu0 0
        %1271 = vmatpush1.bf16.msra.mxu0 0
        %1272 = vmatprep.subr.bf16.mxu0 0
        %1273 = vmatpush1.bf16.msra.mxu0 0
        %1274 = vmatprep.subr.bf16.mxu0 0
        %1275 = vmatpush1.bf16.msra.mxu0 0
        %1276 = vmatprep.subr.bf16.mxu0 0
        %1277 = vmatpush1.bf16.msra.mxu0 0
        %1278 = vmatprep.subr.bf16.mxu0 0
        %1279 = vmatpush1.bf16.msra.mxu0 0
        %1280 = vmatprep.subr.bf16.mxu0 0
        %1281 = vmatpush1.bf16.msra.mxu0 0
        %1282 = vmatprep.subr.bf16.mxu0 0
        %1283 = vmatpush1.bf16.msra.mxu0 0
        %1284 = vmatprep.subr.bf16.mxu0 0
        %1285 = vmatpush1.bf16.msra.mxu0 0
        %1286 = vmatprep.subr.bf16.mxu0 0
        %1287 = vmatpush1.bf16.msra.mxu0 0
        %1288 = vmatprep.subr.bf16.mxu0 0
        %1289 = vmatpush1.bf16.msra.mxu0 0
        %1290 = vmatprep.subr.bf16.mxu0 0
        %1291 = vmatpush1.bf16.msra.mxu0 0
        %1292 = vmatprep.subr.bf16.mxu0 0
        %1293 = vmatpush1.bf16.msra.mxu0 0
        %1294 = vmatprep.subr.bf16.mxu0 0
        %1295 = vmatpush1.bf16.msra.mxu0 0
        %1296 = vmatprep.subr.bf16.mxu0 0
        %1297 = vmatpush1.bf16.msra.mxu0 0
        %1298 = vmatprep.subr.bf16.mxu0 0
        %1299 = vmatpush1.bf16.msra.mxu0 0
        %1300 = vmatprep.mubr.bf16.mxu0 0
        %1301 = vmatmul.mubr.bf16.gmra.mrb[0].mxu0 %v1266
        %v1302 = vpop.f32.mrb[0].mxu0
        %v1303 = vadd.f32 0.0, %v1302
        %v1304 = vpop.f32.mrb[0].mxu0
        %v1305 = vpop.f32.mrb[0].mxu0
        %v1306 = vadd.f32 0.0, %v1305
        %v1307 = vpop.f32.mrb[0].mxu0
        %1308 = vdwg.mxu0
        %1309 = vrot.lane.b32.xlu0 %v428, 56
        %v1310 = vpop.permute.xlu0 %1309
        %v1313 = vsel %vm658, %v1259, 0
        %1315 = vmatprep.subr.bf16.mxu0 0
        %1316 = vmatpush1.bf16.msra.mxu0 %v1310
        %1317 = vmatprep.subr.bf16.mxu0 0
        %1318 = vmatpush1.bf16.msra.mxu0 0
        %1319 = vmatprep.subr.bf16.mxu0 0
        %1320 = vmatpush1.bf16.msra.mxu0 0
        %1321 = vmatprep.subr.bf16.mxu0 0
        %1322 = vmatpush1.bf16.msra.mxu0 0
        %1323 = vmatprep.subr.bf16.mxu0 0
        %1324 = vmatpush1.bf16.msra.mxu0 0
        %1325 = vmatprep.subr.bf16.mxu0 0
        %1326 = vmatpush1.bf16.msra.mxu0 0
        %1327 = vmatprep.subr.bf16.mxu0 0
        %1328 = vmatpush1.bf16.msra.mxu0 0
        %1329 = vmatprep.subr.bf16.mxu0 0
        %1330 = vmatpush1.bf16.msra.mxu0 0
        %1331 = vmatprep.subr.bf16.mxu0 0
        %1332 = vmatpush1.bf16.msra.mxu0 0
        %1333 = vmatprep.subr.bf16.mxu0 0
        %1334 = vmatpush1.bf16.msra.mxu0 0
        %1335 = vmatprep.subr.bf16.mxu0 0
        %1336 = vmatpush1.bf16.msra.mxu0 0
        %1337 = vmatprep.subr.bf16.mxu0 0
        %1338 = vmatpush1.bf16.msra.mxu0 0
        %1339 = vmatprep.subr.bf16.mxu0 0
        %1340 = vmatpush1.bf16.msra.mxu0 0
        %1341 = vmatprep.subr.bf16.mxu0 0
        %1342 = vmatpush1.bf16.msra.mxu0 0
        %1343 = vmatprep.subr.bf16.mxu0 0
        %1344 = vmatpush1.bf16.msra.mxu0 0
        %1345 = vmatprep.subr.bf16.mxu0 0
        %1346 = vmatpush1.bf16.msra.mxu0 0
        %1347 = vmatprep.mubr.bf16.mxu0 0
        %1348 = vmatmul.mubr.bf16.gmra.mrb[0].mxu0 %v1313
        %v1349 = vpop.f32.mrb[0].mxu0
        %v1350 = vadd.f32 0.0, %v1349
        %v1351 = vpop.f32.mrb[0].mxu0
        %v1352 = vpop.f32.mrb[0].mxu0
        %v1353 = vadd.f32 0.0, %v1352
        %v1354 = vpop.f32.mrb[0].mxu0
        %1355 = vdwg.mxu0
        %1356 = vrot.lane.b32.xlu0 %v429, 56
        %v1357 = vpop.permute.xlu0 %1356
        %v1360 = vsel %vm658, %v1260, 0
        %1362 = vmatprep.subr.bf16.mxu0 0
        %1363 = vmatpush1.bf16.msra.mxu0 %v1357
        %1364 = vmatprep.subr.bf16.mxu0 0
        %1365 = vmatpush1.bf16.msra.mxu0 0
        %1366 = vmatprep.subr.bf16.mxu0 0
        %1367 = vmatpush1.bf16.msra.mxu0 0
        %1368 = vmatprep.subr.bf16.mxu0 0
        %1369 = vmatpush1.bf16.msra.mxu0 0
        %1370 = vmatprep.subr.bf16.mxu0 0
        %1371 = vmatpush1.bf16.msra.mxu0 0
        %1372 = vmatprep.subr.bf16.mxu0 0
        %1373 = vmatpush1.bf16.msra.mxu0 0
        %1374 = vmatprep.subr.bf16.mxu0 0
        %1375 = vmatpush1.bf16.msra.mxu0 0
        %1376 = vmatprep.subr.bf16.mxu0 0
        %1377 = vmatpush1.bf16.msra.mxu0 0
        %1378 = vmatprep.subr.bf16.mxu0 0
        %1379 = vmatpush1.bf16.msra.mxu0 0
        %1380 = vmatprep.subr.bf16.mxu0 0
        %1381 = vmatpush1.bf16.msra.mxu0 0
        %1382 = vmatprep.subr.bf16.mxu0 0
        %1383 = vmatpush1.bf16.msra.mxu0 0
        %1384 = vmatprep.subr.bf16.mxu0 0
        %1385 = vmatpush1.bf16.msra.mxu0 0
        %1386 = vmatprep.subr.bf16.mxu0 0
        %1387 = vmatpush1.bf16.msra.mxu0 0
        %1388 = vmatprep.subr.bf16.mxu0 0
        %1389 = vmatpush1.bf16.msra.mxu0 0
        %1390 = vmatprep.subr.bf16.mxu0 0
        %1391 = vmatpush1.bf16.msra.mxu0 0
        %1392 = vmatprep.subr.bf16.mxu0 0
        %1393 = vmatpush1.bf16.msra.mxu0 0
        %1394 = vmatprep.mubr.bf16.mxu0 0
        %1395 = vmatmul.mubr.bf16.gmra.mrb[0].mxu0 %v1360
        %v1396 = vpop.f32.mrb[0].mxu0
        %v1397 = vadd.f32 0.0, %v1396
        %v1398 = vpop.f32.mrb[0].mxu0
        %v1399 = vpop.f32.mrb[0].mxu0
        %v1400 = vadd.f32 0.0, %v1399
        %v1401 = vpop.f32.mrb[0].mxu0
        %1402 = vdwg.mxu0
        %1403 = vrot.lane.b32.xlu0 %v430, 56
        %v1404 = vpop.permute.xlu0 %1403
        %v1407 = vsel %vm658, %v1261, 0
        %1409 = vmatprep.subr.bf16.mxu0 0
        %1410 = vmatpush1.bf16.msra.mxu0 %v1404
        %1411 = vmatprep.subr.bf16.mxu0 0
        %1412 = vmatpush1.bf16.msra.mxu0 0
        %1413 = vmatprep.subr.bf16.mxu0 0
        %1414 = vmatpush1.bf16.msra.mxu0 0
        %1415 = vmatprep.subr.bf16.mxu0 0
        %1416 = vmatpush1.bf16.msra.mxu0 0
        %1417 = vmatprep.subr.bf16.mxu0 0
        %1418 = vmatpush1.bf16.msra.mxu0 0
        %1419 = vmatprep.subr.bf16.mxu0 0
        %1420 = vmatpush1.bf16.msra.mxu0 0
        %1421 = vmatprep.subr.bf16.mxu0 0
        %1422 = vmatpush1.bf16.msra.mxu0 0
        %1423 = vmatprep.subr.bf16.mxu0 0
        %1424 = vmatpush1.bf16.msra.mxu0 0
        %1425 = vmatprep.subr.bf16.mxu0 0
        %1426 = vmatpush1.bf16.msra.mxu0 0
        %1427 = vmatprep.subr.bf16.mxu0 0
        %1428 = vmatpush1.bf16.msra.mxu0 0
        %1429 = vmatprep.subr.bf16.mxu0 0
        %1430 = vmatpush1.bf16.msra.mxu0 0
        %1431 = vmatprep.subr.bf16.mxu0 0
        %1432 = vmatpush1.bf16.msra.mxu0 0
        %1433 = vmatprep.subr.bf16.mxu0 0
        %1434 = vmatpush1.bf16.msra.mxu0 0
        %1435 = vmatprep.subr.bf16.mxu0 0
        %1436 = vmatpush1.bf16.msra.mxu0 0
        %1437 = vmatprep.subr.bf16.mxu0 0
        %1438 = vmatpush1.bf16.msra.mxu0 0
        %1439 = vmatprep.subr.bf16.mxu0 0
        %1440 = vmatpush1.bf16.msra.mxu0 0
        %1441 = vmatprep.mubr.bf16.mxu0 0
        %1442 = vmatmul.mubr.bf16.gmra.mrb[0].mxu0 %v1407
        %v1443 = vpop.f32.mrb[0].mxu0
        %v1444 = vadd.f32 0.0, %v1443
        %v1445 = vpop.f32.mrb[0].mxu0
        %v1446 = vpop.f32.mrb[0].mxu0
        %v1447 = vadd.f32 0.0, %v1446
        %v1448 = vpop.f32.mrb[0].mxu0
        %1449 = vdwg.mxu0
        %v1450 = vpack.c.bf16 %v1306, %v1303
        %v1451 = vpack.c.bf16 %v1353, %v1350
        %v1452 = vpack.c.bf16 %v1400, %v1397
        %v1453 = vpack.c.bf16 %v1447, %v1444
        %1458 = vrot.lane.b32.xlu0 %v1450, 8
        %v1459 = vpop.permute.xlu0 %1458
        %1460 = vrot.lane.b32.xlu0 %v1451, 8
        %v1461 = vpop.permute.xlu0 %1460
        %1462 = vrot.lane.b32.xlu0 %v1452, 8
        %v1463 = vpop.permute.xlu0 %1462
        %1464 = vrot.lane.b32.xlu0 %v1453, 8
        %v1465 = vpop.permute.xlu0 %1464
        %vm1470 = vcmask 130112
        %1471 = vst.msk [vmem:[#allocation2] sm:$0xff] %vm1470, %v1459
        %1472 = vst.msk [vmem:[#allocation2 + $0x8] sm:$0xff] %vm1470, %v1461
        %1473 = vst.msk [vmem:[#allocation2 + $0x10] sm:$0xff] %vm1470, %v1463
        %1474 = vst.msk [vmem:[#allocation2 + $0x18] sm:$0xff] %vm1470, %v1465
        %1475 = vrot.lane.b32.xlu0 %v427, 112
        %v1476 = vpop.permute.xlu0 %1475
        %1477 = vrot.lane.b32.xlu0 %v427, 80
        %v1478 = vpop.permute.xlu0 %1477
        %v1480 = vsel %vm442, %v1476, 0
        %v1483 = vsel %vm442, %v1478, 0
        %1485 = vmatprep.subr.bf16.mxu0 0
        %1486 = vmatpush1.bf16.xpose.msra.mxu0 %v1483
        %1487 = vmatprep.subr.bf16.mxu0 0
        %1488 = vmatpush1.bf16.xpose.msra.mxu0 0
        %1489 = vmatprep.subr.bf16.mxu0 0
        %1490 = vmatpush1.bf16.xpose.msra.mxu0 0
        %1491 = vmatprep.subr.bf16.mxu0 0
        %1492 = vmatpush1.bf16.xpose.msra.mxu0 0
        %1493 = vmatprep.subr.bf16.mxu0 0
        %1494 = vmatpush1.bf16.xpose.msra.mxu0 0
        %1495 = vmatprep.subr.bf16.mxu0 0
        %1496 = vmatpush1.bf16.xpose.msra.mxu0 0
        %1497 = vmatprep.subr.bf16.mxu0 0
        %1498 = vmatpush1.bf16.xpose.msra.mxu0 0
        %1499 = vmatprep.subr.bf16.mxu0 0
        %1500 = vmatpush1.bf16.xpose.msra.mxu0 0
        %1501 = vmatprep.subr.bf16.mxu0 0
        %1502 = vmatpush1.bf16.xpose.msra.mxu0 0
        %1503 = vmatprep.subr.bf16.mxu0 0
        %1504 = vmatpush1.bf16.xpose.msra.mxu0 0
        %1505 = vmatprep.subr.bf16.mxu0 0
        %1506 = vmatpush1.bf16.xpose.msra.mxu0 0
        %1507 = vmatprep.subr.bf16.mxu0 0
        %1508 = vmatpush1.bf16.xpose.msra.mxu0 0
        %1509 = vmatprep.subr.bf16.mxu0 0
        %1510 = vmatpush1.bf16.xpose.msra.mxu0 0
        %1511 = vmatprep.subr.bf16.mxu0 0
        %1512 = vmatpush1.bf16.xpose.msra.mxu0 0
        %1513 = vmatprep.subr.bf16.mxu0 0
        %1514 = vmatpush1.bf16.xpose.msra.mxu0 0
        %1515 = vmatprep.subr.bf16.mxu0 0
        %1516 = vmatpush1.bf16.xpose.msra.mxu0 0
        %1517 = vmatprep.mubr.bf16.mxu0 0
        %1518 = vmatmul.mubr.bf16.gmra.mrb[0].mxu0 %v1480
        %v1519 = vpop.f32.mrb[0].mxu0
        %v1520 = vadd.f32 0.0, %v1519
        %v1521 = vpop.f32.mrb[0].mxu0
        %v1522 = vpop.f32.mrb[0].mxu0
        %v1523 = vadd.f32 0.0, %v1522
        %v1524 = vpop.f32.mrb[0].mxu0
        %1525 = vdwg.mxu0
        %1526 = vrot.lane.b32.xlu0 %v428, 112
        %v1527 = vpop.permute.xlu0 %1526
        %1528 = vrot.lane.b32.xlu0 %v428, 80
        %v1529 = vpop.permute.xlu0 %1528
        %v1531 = vsel %vm442, %v1527, 0
        %v1534 = vsel %vm442, %v1529, 0
        %1536 = vmatprep.subr.bf16.mxu0 0
        %1537 = vmatpush1.bf16.xpose.msra.mxu0 %v1534
        %1538 = vmatprep.subr.bf16.mxu0 0
        %1539 = vmatpush1.bf16.xpose.msra.mxu0 0
        %1540 = vmatprep.subr.bf16.mxu0 0
        %1541 = vmatpush1.bf16.xpose.msra.mxu0 0
        %1542 = vmatprep.subr.bf16.mxu0 0
        %1543 = vmatpush1.bf16.xpose.msra.mxu0 0
        %1544 = vmatprep.subr.bf16.mxu0 0
        %1545 = vmatpush1.bf16.xpose.msra.mxu0 0
        %1546 = vmatprep.subr.bf16.mxu0 0
        %1547 = vmatpush1.bf16.xpose.msra.mxu0 0
        %1548 = vmatprep.subr.bf16.mxu0 0
        %1549 = vmatpush1.bf16.xpose.msra.mxu0 0
        %1550 = vmatprep.subr.bf16.mxu0 0
        %1551 = vmatpush1.bf16.xpose.msra.mxu0 0
        %1552 = vmatprep.subr.bf16.mxu0 0
        %1553 = vmatpush1.bf16.xpose.msra.mxu0 0
        %1554 = vmatprep.subr.bf16.mxu0 0
        %1555 = vmatpush1.bf16.xpose.msra.mxu0 0
        %1556 = vmatprep.subr.bf16.mxu0 0
        %1557 = vmatpush1.bf16.xpose.msra.mxu0 0
        %1558 = vmatprep.subr.bf16.mxu0 0
        %1559 = vmatpush1.bf16.xpose.msra.mxu0 0
        %1560 = vmatprep.subr.bf16.mxu0 0
        %1561 = vmatpush1.bf16.xpose.msra.mxu0 0
        %1562 = vmatprep.subr.bf16.mxu0 0
        %1563 = vmatpush1.bf16.xpose.msra.mxu0 0
        %1564 = vmatprep.subr.bf16.mxu0 0
        %1565 = vmatpush1.bf16.xpose.msra.mxu0 0
        %1566 = vmatprep.subr.bf16.mxu0 0
        %1567 = vmatpush1.bf16.xpose.msra.mxu0 0
        %1568 = vmatprep.mubr.bf16.mxu0 0
        %1569 = vmatmul.mubr.bf16.gmra.mrb[0].mxu0 %v1531
        %v1570 = vpop.f32.mrb[0].mxu0
        %v1571 = vadd.f32 0.0, %v1570
        %v1572 = vpop.f32.mrb[0].mxu0
        %v1573 = vpop.f32.mrb[0].mxu0
        %v1574 = vadd.f32 0.0, %v1573
        %v1575 = vpop.f32.mrb[0].mxu0
        %1576 = vdwg.mxu0
        %1577 = vrot.lane.b32.xlu0 %v429, 112
        %v1578 = vpop.permute.xlu0 %1577
        %1579 = vrot.lane.b32.xlu0 %v429, 80
        %v1580 = vpop.permute.xlu0 %1579
        %v1582 = vsel %vm442, %v1578, 0
        %v1585 = vsel %vm442, %v1580, 0
        %1587 = vmatprep.subr.bf16.mxu0 0
        %1588 = vmatpush1.bf16.xpose.msra.mxu0 %v1585
        %1589 = vmatprep.subr.bf16.mxu0 0
        %1590 = vmatpush1.bf16.xpose.msra.mxu0 0
        %1591 = vmatprep.subr.bf16.mxu0 0
        %1592 = vmatpush1.bf16.xpose.msra.mxu0 0
        %1593 = vmatprep.subr.bf16.mxu0 0
        %1594 = vmatpush1.bf16.xpose.msra.mxu0 0
        %1595 = vmatprep.subr.bf16.mxu0 0
        %1596 = vmatpush1.bf16.xpose.msra.mxu0 0
        %1597 = vmatprep.subr.bf16.mxu0 0
        %1598 = vmatpush1.bf16.xpose.msra.mxu0 0
        %1599 = vmatprep.subr.bf16.mxu0 0
        %1600 = vmatpush1.bf16.xpose.msra.mxu0 0
        %1601 = vmatprep.subr.bf16.mxu0 0
        %1602 = vmatpush1.bf16.xpose.msra.mxu0 0
        %1603 = vmatprep.subr.bf16.mxu0 0
        %1604 = vmatpush1.bf16.xpose.msra.mxu0 0
        %1605 = vmatprep.subr.bf16.mxu0 0
        %1606 = vmatpush1.bf16.xpose.msra.mxu0 0
        %1607 = vmatprep.subr.bf16.mxu0 0
        %1608 = vmatpush1.bf16.xpose.msra.mxu0 0
        %1609 = vmatprep.subr.bf16.mxu0 0
        %1610 = vmatpush1.bf16.xpose.msra.mxu0 0
        %1611 = vmatprep.subr.bf16.mxu0 0
        %1612 = vmatpush1.bf16.xpose.msra.mxu0 0
        %1613 = vmatprep.subr.bf16.mxu0 0
        %1614 = vmatpush1.bf16.xpose.msra.mxu0 0
        %1615 = vmatprep.subr.bf16.mxu0 0
        %1616 = vmatpush1.bf16.xpose.msra.mxu0 0
        %1617 = vmatprep.subr.bf16.mxu0 0
        %1618 = vmatpush1.bf16.xpose.msra.mxu0 0
        %1619 = vmatprep.mubr.bf16.mxu0 0
        %1620 = vmatmul.mubr.bf16.gmra.mrb[0].mxu0 %v1582
        %v1621 = vpop.f32.mrb[0].mxu0
        %v1622 = vadd.f32 0.0, %v1621
        %v1623 = vpop.f32.mrb[0].mxu0
        %v1624 = vpop.f32.mrb[0].mxu0
        %v1625 = vadd.f32 0.0, %v1624
        %v1626 = vpop.f32.mrb[0].mxu0
        %1627 = vdwg.mxu0
        %1628 = vrot.lane.b32.xlu0 %v430, 112
        %v1629 = vpop.permute.xlu0 %1628
        %1630 = vrot.lane.b32.xlu0 %v430, 80
        %v1631 = vpop.permute.xlu0 %1630
        %v1633 = vsel %vm442, %v1629, 0
        %v1636 = vsel %vm442, %v1631, 0
        %1638 = vmatprep.subr.bf16.mxu0 0
        %1639 = vmatpush1.bf16.xpose.msra.mxu0 %v1636
        %1640 = vmatprep.subr.bf16.mxu0 0
        %1641 = vmatpush1.bf16.xpose.msra.mxu0 0
        %1642 = vmatprep.subr.bf16.mxu0 0
        %1643 = vmatpush1.bf16.xpose.msra.mxu0 0
        %1644 = vmatprep.subr.bf16.mxu0 0
        %1645 = vmatpush1.bf16.xpose.msra.mxu0 0
        %1646 = vmatprep.subr.bf16.mxu0 0
        %1647 = vmatpush1.bf16.xpose.msra.mxu0 0
        %1648 = vmatprep.subr.bf16.mxu0 0
        %1649 = vmatpush1.bf16.xpose.msra.mxu0 0
        %1650 = vmatprep.subr.bf16.mxu0 0
        %1651 = vmatpush1.bf16.xpose.msra.mxu0 0
        %1652 = vmatprep.subr.bf16.mxu0 0
        %1653 = vmatpush1.bf16.xpose.msra.mxu0 0
        %1654 = vmatprep.subr.bf16.mxu0 0
        %1655 = vmatpush1.bf16.xpose.msra.mxu0 0
        %1656 = vmatprep.subr.bf16.mxu0 0
        %1657 = vmatpush1.bf16.xpose.msra.mxu0 0
        %1658 = vmatprep.subr.bf16.mxu0 0
        %1659 = vmatpush1.bf16.xpose.msra.mxu0 0
        %1660 = vmatprep.subr.bf16.mxu0 0
        %1661 = vmatpush1.bf16.xpose.msra.mxu0 0
        %1662 = vmatprep.subr.bf16.mxu0 0
        %1663 = vmatpush1.bf16.xpose.msra.mxu0 0
        %1664 = vmatprep.subr.bf16.mxu0 0
        %1665 = vmatpush1.bf16.xpose.msra.mxu0 0
        %1666 = vmatprep.subr.bf16.mxu0 0
        %1667 = vmatpush1.bf16.xpose.msra.mxu0 0
        %1668 = vmatprep.subr.bf16.mxu0 0
        %1669 = vmatpush1.bf16.xpose.msra.mxu0 0
        %1670 = vmatprep.mubr.bf16.mxu0 0
        %1671 = vmatmul.mubr.bf16.gmra.mrb[0].mxu0 %v1633
        %v1672 = vpop.f32.mrb[0].mxu0
        %v1673 = vadd.f32 0.0, %v1672
        %v1674 = vpop.f32.mrb[0].mxu0
        %v1675 = vpop.f32.mrb[0].mxu0
        %v1676 = vadd.f32 0.0, %v1675
        %v1677 = vpop.f32.mrb[0].mxu0
        %1678 = vdwg.mxu0
        %s1679 = scalar_lea.vmem %s3, 32
        %v1680 = vld [vmem:[%s1679] sm:$0xff]
        %v1681 = vld [vmem:[%s1679 + $0x8] sm:$0xff]
        %v1682 = vadd.f32 %v1680, %v431
        %v1683 = vadd.f32 %v1681, %v432
        %v1684 = vadd.f32 %v1680, %v433
        %v1685 = vadd.f32 %v1681, %v434
        %v1686 = vadd.f32 %v1680, %v435
        %v1687 = vadd.f32 %v1681, %v436
        %v1688 = vadd.f32 %v1680, %v437
        %v1689 = vadd.f32 %v1681, %v438
        %v1690 = vadd.f32 %v1520, %v1682
        %v1691 = vadd.f32 %v1523, %v1683
        %v1692 = vadd.f32 %v1571, %v1684
        %v1693 = vadd.f32 %v1574, %v1685
        %v1694 = vadd.f32 %v1622, %v1686
        %v1695 = vadd.f32 %v1625, %v1687
        %v1696 = vadd.f32 %v1673, %v1688
        %v1697 = vadd.f32 %v1676, %v1689
        %v1698 = vsel %vm658, %v1690, -inf
        %1699 = vmax.xlane.f32.xlu0 %v1698
        %v1700 = vpop.xlane.xlu0 %1699
        %v1701 = vsel %vm658, %v1691, -inf
        %1702 = vmax.xlane.f32.xlu0 %v1701
        %v1703 = vpop.xlane.xlu0 %1702
        %v1704 = vsel %vm658, %v1692, -inf
        %1705 = vmax.xlane.f32.xlu0 %v1704
        %v1706 = vpop.xlane.xlu0 %1705
        %v1707 = vsel %vm658, %v1693, -inf
        %1708 = vmax.xlane.f32.xlu0 %v1707
        %v1709 = vpop.xlane.xlu0 %1708
        %v1710 = vsel %vm658, %v1694, -inf
        %1711 = vmax.xlane.f32.xlu0 %v1710
        %v1712 = vpop.xlane.xlu0 %1711
        %v1713 = vsel %vm658, %v1695, -inf
        %1714 = vmax.xlane.f32.xlu0 %v1713
        %v1715 = vpop.xlane.xlu0 %1714
        %v1716 = vsel %vm658, %v1696, -inf
        %1717 = vmax.xlane.f32.xlu0 %v1716
        %v1718 = vpop.xlane.xlu0 %1717
        %v1719 = vsel %vm658, %v1697, -inf
        %1720 = vmax.xlane.f32.xlu0 %v1719
        %v1721 = vpop.xlane.xlu0 %1720
        %v1722 = vsub.f32 %v1690, %v1700
        %v1723 = vsub.f32 %v1691, %v1703
        %v1724 = vsub.f32 %v1692, %v1706
        %v1725 = vsub.f32 %v1693, %v1709
        %v1726 = vsub.f32 %v1694, %v1712
        %v1727 = vsub.f32 %v1695, %v1715
        %v1728 = vsub.f32 %v1696, %v1718
        %v1729 = vsub.f32 %v1697, %v1721
        %v1730 = vmul.f32 %v1722, 1.442695
        %v1731 = vpow.pop %v1730
        %v1732 = vmul.f32 %v1723, 1.442695
        %v1733 = vpow.pop %v1732
        %v1734 = vmul.f32 %v1724, 1.442695
        %v1735 = vpow.pop %v1734
        %v1736 = vmul.f32 %v1725, 1.442695
        %v1737 = vpow.pop %v1736
        %v1738 = vmul.f32 %v1726, 1.442695
        %v1739 = vpow.pop %v1738
        %v1740 = vmul.f32 %v1727, 1.442695
        %v1741 = vpow.pop %v1740
        %v1742 = vmul.f32 %v1728, 1.442695
        %v1743 = vpow.pop %v1742
        %v1744 = vmul.f32 %v1729, 1.442695
        %v1745 = vpow.pop %v1744
        %v1746 = vsel %vm658, %v1731, 0.0
        %1747 = vadd.xlane.f32.xlu0 %v1746
        %v1748 = vpop.xlane.xlu0 %1747
        %v1749 = vsel %vm658, %v1733, 0.0
        %1750 = vadd.xlane.f32.xlu0 %v1749
        %v1751 = vpop.xlane.xlu0 %1750
        %v1752 = vsel %vm658, %v1735, 0.0
        %1753 = vadd.xlane.f32.xlu0 %v1752
        %v1754 = vpop.xlane.xlu0 %1753
        %v1755 = vsel %vm658, %v1737, 0.0
        %1756 = vadd.xlane.f32.xlu0 %v1755
        %v1757 = vpop.xlane.xlu0 %1756
        %v1758 = vsel %vm658, %v1739, 0.0
        %1759 = vadd.xlane.f32.xlu0 %v1758
        %v1760 = vpop.xlane.xlu0 %1759
        %v1761 = vsel %vm658, %v1741, 0.0
        %1762 = vadd.xlane.f32.xlu0 %v1761
        %v1763 = vpop.xlane.xlu0 %1762
        %v1764 = vsel %vm658, %v1743, 0.0
        %1765 = vadd.xlane.f32.xlu0 %v1764
        %v1766 = vpop.xlane.xlu0 %1765
        %v1767 = vsel %vm658, %v1745, 0.0
        %1768 = vadd.xlane.f32.xlu0 %v1767
        %v1769 = vpop.xlane.xlu0 %1768
        %v1770 = vrcp.pop %v1748
        %v1771 = vrcp.pop %v1751
        %v1772 = vrcp.pop %v1754
        %v1773 = vrcp.pop %v1757
        %v1774 = vrcp.pop %v1760
        %v1775 = vrcp.pop %v1763
        %v1776 = vrcp.pop %v1766
        %v1777 = vrcp.pop %v1769
        %v1778 = vmul.f32 %v1731, %v1770
        %v1779 = vmul.f32 %v1733, %v1771
        %v1780 = vmul.f32 %v1735, %v1772
        %v1781 = vmul.f32 %v1737, %v1773
        %v1782 = vmul.f32 %v1739, %v1774
        %v1783 = vmul.f32 %v1741, %v1775
        %v1784 = vmul.f32 %v1743, %v1776
        %v1785 = vmul.f32 %v1745, %v1777
        %v1786 = vpack.c.bf16 %v1779, %v1778
        %v1787 = vpack.c.bf16 %v1781, %v1780
        %v1788 = vpack.c.bf16 %v1783, %v1782
        %v1789 = vpack.c.bf16 %v1785, %v1784
        %1790 = vrot.lane.b32.xlu0 %v427, 48
        %v1791 = vpop.permute.xlu0 %1790
        %v1794 = vsel %vm658, %v1786, 0
        %1796 = vmatprep.subr.bf16.mxu0 0
        %1797 = vmatpush1.bf16.msra.mxu0 %v1791
        %1798 = vmatprep.subr.bf16.mxu0 0
        %1799 = vmatpush1.bf16.msra.mxu0 0
        %1800 = vmatprep.subr.bf16.mxu0 0
        %1801 = vmatpush1.bf16.msra.mxu0 0
        %1802 = vmatprep.subr.bf16.mxu0 0
        %1803 = vmatpush1.bf16.msra.mxu0 0
        %1804 = vmatprep.subr.bf16.mxu0 0
        %1805 = vmatpush1.bf16.msra.mxu0 0
        %1806 = vmatprep.subr.bf16.mxu0 0
        %1807 = vmatpush1.bf16.msra.mxu0 0
        %1808 = vmatprep.subr.bf16.mxu0 0
        %1809 = vmatpush1.bf16.msra.mxu0 0
        %1810 = vmatprep.subr.bf16.mxu0 0
        %1811 = vmatpush1.bf16.msra.mxu0 0
        %1812 = vmatprep.subr.bf16.mxu0 0
        %1813 = vmatpush1.bf16.msra.mxu0 0
        %1814 = vmatprep.subr.bf16.mxu0 0
        %1815 = vmatpush1.bf16.msra.mxu0 0
        %1816 = vmatprep.subr.bf16.mxu0 0
        %1817 = vmatpush1.bf16.msra.mxu0 0
        %1818 = vmatprep.subr.bf16.mxu0 0
        %1819 = vmatpush1.bf16.msra.mxu0 0
        %1820 = vmatprep.subr.bf16.mxu0 0
        %1821 = vmatpush1.bf16.msra.mxu0 0
        %1822 = vmatprep.subr.bf16.mxu0 0
        %1823 = vmatpush1.bf16.msra.mxu0 0
        %1824 = vmatprep.subr.bf16.mxu0 0
        %1825 = vmatpush1.bf16.msra.mxu0 0
        %1826 = vmatprep.subr.bf16.mxu0 0
        %1827 = vmatpush1.bf16.msra.mxu0 0
        %1828 = vmatprep.mubr.bf16.mxu0 0
        %1829 = vmatmul.mubr.bf16.gmra.mrb[0].mxu0 %v1794
        %v1830 = vpop.f32.mrb[0].mxu0
        %v1831 = vadd.f32 0.0, %v1830
        %v1832 = vpop.f32.mrb[0].mxu0
        %v1833 = vpop.f32.mrb[0].mxu0
        %v1834 = vadd.f32 0.0, %v1833
        %v1835 = vpop.f32.mrb[0].mxu0
        %1836 = vdwg.mxu0
        %1837 = vrot.lane.b32.xlu0 %v428, 48
        %v1838 = vpop.permute.xlu0 %1837
        %v1841 = vsel %vm658, %v1787, 0
        %1843 = vmatprep.subr.bf16.mxu0 0
        %1844 = vmatpush1.bf16.msra.mxu0 %v1838
        %1845 = vmatprep.subr.bf16.mxu0 0
        %1846 = vmatpush1.bf16.msra.mxu0 0
        %1847 = vmatprep.subr.bf16.mxu0 0
        %1848 = vmatpush1.bf16.msra.mxu0 0
        %1849 = vmatprep.subr.bf16.mxu0 0
        %1850 = vmatpush1.bf16.msra.mxu0 0
        %1851 = vmatprep.subr.bf16.mxu0 0
        %1852 = vmatpush1.bf16.msra.mxu0 0
        %1853 = vmatprep.subr.bf16.mxu0 0
        %1854 = vmatpush1.bf16.msra.mxu0 0
        %1855 = vmatprep.subr.bf16.mxu0 0
        %1856 = vmatpush1.bf16.msra.mxu0 0
        %1857 = vmatprep.subr.bf16.mxu0 0
        %1858 = vmatpush1.bf16.msra.mxu0 0
        %1859 = vmatprep.subr.bf16.mxu0 0
        %1860 = vmatpush1.bf16.msra.mxu0 0
        %1861 = vmatprep.subr.bf16.mxu0 0
        %1862 = vmatpush1.bf16.msra.mxu0 0
        %1863 = vmatprep.subr.bf16.mxu0 0
        %1864 = vmatpush1.bf16.msra.mxu0 0
        %1865 = vmatprep.subr.bf16.mxu0 0
        %1866 = vmatpush1.bf16.msra.mxu0 0
        %1867 = vmatprep.subr.bf16.mxu0 0
        %1868 = vmatpush1.bf16.msra.mxu0 0
        %1869 = vmatprep.subr.bf16.mxu0 0
        %1870 = vmatpush1.bf16.msra.mxu0 0
        %1871 = vmatprep.subr.bf16.mxu0 0
        %1872 = vmatpush1.bf16.msra.mxu0 0
        %1873 = vmatprep.subr.bf16.mxu0 0
        %1874 = vmatpush1.bf16.msra.mxu0 0
        %1875 = vmatprep.mubr.bf16.mxu0 0
        %1876 = vmatmul.mubr.bf16.gmra.mrb[0].mxu0 %v1841
        %v1877 = vpop.f32.mrb[0].mxu0
        %v1878 = vadd.f32 0.0, %v1877
        %v1879 = vpop.f32.mrb[0].mxu0
        %v1880 = vpop.f32.mrb[0].mxu0
        %v1881 = vadd.f32 0.0, %v1880
        %v1882 = vpop.f32.mrb[0].mxu0
        %1883 = vdwg.mxu0
        %1884 = vrot.lane.b32.xlu0 %v429, 48
        %v1885 = vpop.permute.xlu0 %1884
        %v1888 = vsel %vm658, %v1788, 0
        %1890 = vmatprep.subr.bf16.mxu0 0
        %1891 = vmatpush1.bf16.msra.mxu0 %v1885
        %1892 = vmatprep.subr.bf16.mxu0 0
        %1893 = vmatpush1.bf16.msra.mxu0 0
        %1894 = vmatprep.subr.bf16.mxu0 0
        %1895 = vmatpush1.bf16.msra.mxu0 0
        %1896 = vmatprep.subr.bf16.mxu0 0
        %1897 = vmatpush1.bf16.msra.mxu0 0
        %1898 = vmatprep.subr.bf16.mxu0 0
        %1899 = vmatpush1.bf16.msra.mxu0 0
        %1900 = vmatprep.subr.bf16.mxu0 0
        %1901 = vmatpush1.bf16.msra.mxu0 0
        %1902 = vmatprep.subr.bf16.mxu0 0
        %1903 = vmatpush1.bf16.msra.mxu0 0
        %1904 = vmatprep.subr.bf16.mxu0 0
        %1905 = vmatpush1.bf16.msra.mxu0 0
        %1906 = vmatprep.subr.bf16.mxu0 0
        %1907 = vmatpush1.bf16.msra.mxu0 0
        %1908 = vmatprep.subr.bf16.mxu0 0
        %1909 = vmatpush1.bf16.msra.mxu0 0
        %1910 = vmatprep.subr.bf16.mxu0 0
        %1911 = vmatpush1.bf16.msra.mxu0 0
        %1912 = vmatprep.subr.bf16.mxu0 0
        %1913 = vmatpush1.bf16.msra.mxu0 0
        %1914 = vmatprep.subr.bf16.mxu0 0
        %1915 = vmatpush1.bf16.msra.mxu0 0
        %1916 = vmatprep.subr.bf16.mxu0 0
        %1917 = vmatpush1.bf16.msra.mxu0 0
        %1918 = vmatprep.subr.bf16.mxu0 0
        %1919 = vmatpush1.bf16.msra.mxu0 0
        %1920 = vmatprep.subr.bf16.mxu0 0
        %1921 = vmatpush1.bf16.msra.mxu0 0
        %1922 = vmatprep.mubr.bf16.mxu0 0
        %1923 = vmatmul.mubr.bf16.gmra.mrb[0].mxu0 %v1888
        %v1924 = vpop.f32.mrb[0].mxu0
        %v1925 = vadd.f32 0.0, %v1924
        %v1926 = vpop.f32.mrb[0].mxu0
        %v1927 = vpop.f32.mrb[0].mxu0
        %v1928 = vadd.f32 0.0, %v1927
        %v1929 = vpop.f32.mrb[0].mxu0
        %1930 = vdwg.mxu0
        %1931 = vrot.lane.b32.xlu0 %v430, 48
        %v1932 = vpop.permute.xlu0 %1931
        %v1935 = vsel %vm658, %v1789, 0
        %1937 = vmatprep.subr.bf16.mxu0 0
        %1938 = vmatpush1.bf16.msra.mxu0 %v1932
        %1939 = vmatprep.subr.bf16.mxu0 0
        %1940 = vmatpush1.bf16.msra.mxu0 0
        %1941 = vmatprep.subr.bf16.mxu0 0
        %1942 = vmatpush1.bf16.msra.mxu0 0
        %1943 = vmatprep.subr.bf16.mxu0 0
        %1944 = vmatpush1.bf16.msra.mxu0 0
        %1945 = vmatprep.subr.bf16.mxu0 0
        %1946 = vmatpush1.bf16.msra.mxu0 0
        %1947 = vmatprep.subr.bf16.mxu0 0
        %1948 = vmatpush1.bf16.msra.mxu0 0
        %1949 = vmatprep.subr.bf16.mxu0 0
        %1950 = vmatpush1.bf16.msra.mxu0 0
        %1951 = vmatprep.subr.bf16.mxu0 0
        %1952 = vmatpush1.bf16.msra.mxu0 0
        %1953 = vmatprep.subr.bf16.mxu0 0
        %1954 = vmatpush1.bf16.msra.mxu0 0
        %1955 = vmatprep.subr.bf16.mxu0 0
        %1956 = vmatpush1.bf16.msra.mxu0 0
        %1957 = vmatprep.subr.bf16.mxu0 0
        %1958 = vmatpush1.bf16.msra.mxu0 0
        %1959 = vmatprep.subr.bf16.mxu0 0
        %1960 = vmatpush1.bf16.msra.mxu0 0
        %1961 = vmatprep.subr.bf16.mxu0 0
        %1962 = vmatpush1.bf16.msra.mxu0 0
        %1963 = vmatprep.subr.bf16.mxu0 0
        %1964 = vmatpush1.bf16.msra.mxu0 0
        %1965 = vmatprep.subr.bf16.mxu0 0
        %1966 = vmatpush1.bf16.msra.mxu0 0
        %1967 = vmatprep.subr.bf16.mxu0 0
        %1968 = vmatpush1.bf16.msra.mxu0 0
        %1969 = vmatprep.mubr.bf16.mxu0 0
        %1970 = vmatmul.mubr.bf16.gmra.mrb[0].mxu0 %v1935
        %v1971 = vpop.f32.mrb[0].mxu0
        %v1972 = vadd.f32 0.0, %v1971
        %v1973 = vpop.f32.mrb[0].mxu0
        %v1974 = vpop.f32.mrb[0].mxu0
        %v1975 = vadd.f32 0.0, %v1974
        %v1976 = vpop.f32.mrb[0].mxu0
        %1977 = vdwg.mxu0
        %v1978 = vpack.c.bf16 %v1834, %v1831
        %v1979 = vpack.c.bf16 %v1881, %v1878
        %v1980 = vpack.c.bf16 %v1928, %v1925
        %v1981 = vpack.c.bf16 %v1975, %v1972
        %1986 = vrot.lane.b32.xlu0 %v1978, 16
        %v1987 = vpop.permute.xlu0 %1986
        %1988 = vrot.lane.b32.xlu0 %v1979, 16
        %v1989 = vpop.permute.xlu0 %1988
        %1990 = vrot.lane.b32.xlu0 %v1980, 16
        %v1991 = vpop.permute.xlu0 %1990
        %1992 = vrot.lane.b32.xlu0 %v1981, 16
        %v1993 = vpop.permute.xlu0 %1992
        %vm1998 = vcmask 195712
        %1999 = vst.msk [vmem:[#allocation2] sm:$0xff] %vm1998, %v1987
        %2000 = vst.msk [vmem:[#allocation2 + $0x8] sm:$0xff] %vm1998, %v1989
        %2001 = vst.msk [vmem:[#allocation2 + $0x10] sm:$0xff] %vm1998, %v1991
        %2002 = vst.msk [vmem:[#allocation2 + $0x18] sm:$0xff] %vm1998, %v1993
        %2003 = vrot.lane.b32.xlu0 %v427, 104
        %v2004 = vpop.permute.xlu0 %2003
        %2005 = vrot.lane.b32.xlu0 %v427, 72
        %v2006 = vpop.permute.xlu0 %2005
        %v2008 = vsel %vm442, %v2004, 0
        %v2011 = vsel %vm442, %v2006, 0
        %2013 = vmatprep.subr.bf16.mxu0 0
        %2014 = vmatpush1.bf16.xpose.msra.mxu0 %v2011
        %2015 = vmatprep.subr.bf16.mxu0 0
        %2016 = vmatpush1.bf16.xpose.msra.mxu0 0
        %2017 = vmatprep.subr.bf16.mxu0 0
        %2018 = vmatpush1.bf16.xpose.msra.mxu0 0
        %2019 = vmatprep.subr.bf16.mxu0 0
        %2020 = vmatpush1.bf16.xpose.msra.mxu0 0
        %2021 = vmatprep.subr.bf16.mxu0 0
        %2022 = vmatpush1.bf16.xpose.msra.mxu0 0
        %2023 = vmatprep.subr.bf16.mxu0 0
        %2024 = vmatpush1.bf16.xpose.msra.mxu0 0
        %2025 = vmatprep.subr.bf16.mxu0 0
        %2026 = vmatpush1.bf16.xpose.msra.mxu0 0
        %2027 = vmatprep.subr.bf16.mxu0 0
        %2028 = vmatpush1.bf16.xpose.msra.mxu0 0
        %2029 = vmatprep.subr.bf16.mxu0 0
        %2030 = vmatpush1.bf16.xpose.msra.mxu0 0
        %2031 = vmatprep.subr.bf16.mxu0 0
        %2032 = vmatpush1.bf16.xpose.msra.mxu0 0
        %2033 = vmatprep.subr.bf16.mxu0 0
        %2034 = vmatpush1.bf16.xpose.msra.mxu0 0
        %2035 = vmatprep.subr.bf16.mxu0 0
        %2036 = vmatpush1.bf16.xpose.msra.mxu0 0
        %2037 = vmatprep.subr.bf16.mxu0 0
        %2038 = vmatpush1.bf16.xpose.msra.mxu0 0
        %2039 = vmatprep.subr.bf16.mxu0 0
        %2040 = vmatpush1.bf16.xpose.msra.mxu0 0
        %2041 = vmatprep.subr.bf16.mxu0 0
        %2042 = vmatpush1.bf16.xpose.msra.mxu0 0
        %2043 = vmatprep.subr.bf16.mxu0 0
        %2044 = vmatpush1.bf16.xpose.msra.mxu0 0
        %2045 = vmatprep.mubr.bf16.mxu0 0
        %2046 = vmatmul.mubr.bf16.gmra.mrb[0].mxu0 %v2008
        %v2047 = vpop.f32.mrb[0].mxu0
        %v2048 = vadd.f32 0.0, %v2047
        %v2049 = vpop.f32.mrb[0].mxu0
        %v2050 = vpop.f32.mrb[0].mxu0
        %v2051 = vadd.f32 0.0, %v2050
        %v2052 = vpop.f32.mrb[0].mxu0
        %2053 = vdwg.mxu0
        %2054 = vrot.lane.b32.xlu0 %v428, 104
        %v2055 = vpop.permute.xlu0 %2054
        %2056 = vrot.lane.b32.xlu0 %v428, 72
        %v2057 = vpop.permute.xlu0 %2056
        %v2059 = vsel %vm442, %v2055, 0
        %v2062 = vsel %vm442, %v2057, 0
        %2064 = vmatprep.subr.bf16.mxu0 0
        %2065 = vmatpush1.bf16.xpose.msra.mxu0 %v2062
        %2066 = vmatprep.subr.bf16.mxu0 0
        %2067 = vmatpush1.bf16.xpose.msra.mxu0 0
        %2068 = vmatprep.subr.bf16.mxu0 0
        %2069 = vmatpush1.bf16.xpose.msra.mxu0 0
        %2070 = vmatprep.subr.bf16.mxu0 0
        %2071 = vmatpush1.bf16.xpose.msra.mxu0 0
        %2072 = vmatprep.subr.bf16.mxu0 0
        %2073 = vmatpush1.bf16.xpose.msra.mxu0 0
        %2074 = vmatprep.subr.bf16.mxu0 0
        %2075 = vmatpush1.bf16.xpose.msra.mxu0 0
        %2076 = vmatprep.subr.bf16.mxu0 0
        %2077 = vmatpush1.bf16.xpose.msra.mxu0 0
        %2078 = vmatprep.subr.bf16.mxu0 0
        %2079 = vmatpush1.bf16.xpose.msra.mxu0 0
        %2080 = vmatprep.subr.bf16.mxu0 0
        %2081 = vmatpush1.bf16.xpose.msra.mxu0 0
        %2082 = vmatprep.subr.bf16.mxu0 0
        %2083 = vmatpush1.bf16.xpose.msra.mxu0 0
        %2084 = vmatprep.subr.bf16.mxu0 0
        %2085 = vmatpush1.bf16.xpose.msra.mxu0 0
        %2086 = vmatprep.subr.bf16.mxu0 0
        %2087 = vmatpush1.bf16.xpose.msra.mxu0 0
        %2088 = vmatprep.subr.bf16.mxu0 0
        %2089 = vmatpush1.bf16.xpose.msra.mxu0 0
        %2090 = vmatprep.subr.bf16.mxu0 0
        %2091 = vmatpush1.bf16.xpose.msra.mxu0 0
        %2092 = vmatprep.subr.bf16.mxu0 0
        %2093 = vmatpush1.bf16.xpose.msra.mxu0 0
        %2094 = vmatprep.subr.bf16.mxu0 0
        %2095 = vmatpush1.bf16.xpose.msra.mxu0 0
        %2096 = vmatprep.mubr.bf16.mxu0 0
        %2097 = vmatmul.mubr.bf16.gmra.mrb[0].mxu0 %v2059
        %v2098 = vpop.f32.mrb[0].mxu0
        %v2099 = vadd.f32 0.0, %v2098
        %v2100 = vpop.f32.mrb[0].mxu0
        %v2101 = vpop.f32.mrb[0].mxu0
        %v2102 = vadd.f32 0.0, %v2101
        %v2103 = vpop.f32.mrb[0].mxu0
        %2104 = vdwg.mxu0
        %2105 = vrot.lane.b32.xlu0 %v429, 104
        %v2106 = vpop.permute.xlu0 %2105
        %2107 = vrot.lane.b32.xlu0 %v429, 72
        %v2108 = vpop.permute.xlu0 %2107
        %v2110 = vsel %vm442, %v2106, 0
        %v2113 = vsel %vm442, %v2108, 0
        %2115 = vmatprep.subr.bf16.mxu0 0
        %2116 = vmatpush1.bf16.xpose.msra.mxu0 %v2113
        %2117 = vmatprep.subr.bf16.mxu0 0
        %2118 = vmatpush1.bf16.xpose.msra.mxu0 0
        %2119 = vmatprep.subr.bf16.mxu0 0
        %2120 = vmatpush1.bf16.xpose.msra.mxu0 0
        %2121 = vmatprep.subr.bf16.mxu0 0
        %2122 = vmatpush1.bf16.xpose.msra.mxu0 0
        %2123 = vmatprep.subr.bf16.mxu0 0
        %2124 = vmatpush1.bf16.xpose.msra.mxu0 0
        %2125 = vmatprep.subr.bf16.mxu0 0
        %2126 = vmatpush1.bf16.xpose.msra.mxu0 0
        %2127 = vmatprep.subr.bf16.mxu0 0
        %2128 = vmatpush1.bf16.xpose.msra.mxu0 0
        %2129 = vmatprep.subr.bf16.mxu0 0
        %2130 = vmatpush1.bf16.xpose.msra.mxu0 0
        %2131 = vmatprep.subr.bf16.mxu0 0
        %2132 = vmatpush1.bf16.xpose.msra.mxu0 0
        %2133 = vmatprep.subr.bf16.mxu0 0
        %2134 = vmatpush1.bf16.xpose.msra.mxu0 0
        %2135 = vmatprep.subr.bf16.mxu0 0
        %2136 = vmatpush1.bf16.xpose.msra.mxu0 0
        %2137 = vmatprep.subr.bf16.mxu0 0
        %2138 = vmatpush1.bf16.xpose.msra.mxu0 0
        %2139 = vmatprep.subr.bf16.mxu0 0
        %2140 = vmatpush1.bf16.xpose.msra.mxu0 0
        %2141 = vmatprep.subr.bf16.mxu0 0
        %2142 = vmatpush1.bf16.xpose.msra.mxu0 0
        %2143 = vmatprep.subr.bf16.mxu0 0
        %2144 = vmatpush1.bf16.xpose.msra.mxu0 0
        %2145 = vmatprep.subr.bf16.mxu0 0
        %2146 = vmatpush1.bf16.xpose.msra.mxu0 0
        %2147 = vmatprep.mubr.bf16.mxu0 0
        %2148 = vmatmul.mubr.bf16.gmra.mrb[0].mxu0 %v2110
        %v2149 = vpop.f32.mrb[0].mxu0
        %v2150 = vadd.f32 0.0, %v2149
        %v2151 = vpop.f32.mrb[0].mxu0
        %v2152 = vpop.f32.mrb[0].mxu0
        %v2153 = vadd.f32 0.0, %v2152
        %v2154 = vpop.f32.mrb[0].mxu0
        %2155 = vdwg.mxu0
        %2156 = vrot.lane.b32.xlu0 %v430, 104
        %v2157 = vpop.permute.xlu0 %2156
        %2158 = vrot.lane.b32.xlu0 %v430, 72
        %v2159 = vpop.permute.xlu0 %2158
        %v2161 = vsel %vm442, %v2157, 0
        %v2164 = vsel %vm442, %v2159, 0
        %2166 = vmatprep.subr.bf16.mxu0 0
        %2167 = vmatpush1.bf16.xpose.msra.mxu0 %v2164
        %2168 = vmatprep.subr.bf16.mxu0 0
        %2169 = vmatpush1.bf16.xpose.msra.mxu0 0
        %2170 = vmatprep.subr.bf16.mxu0 0
        %2171 = vmatpush1.bf16.xpose.msra.mxu0 0
        %2172 = vmatprep.subr.bf16.mxu0 0
        %2173 = vmatpush1.bf16.xpose.msra.mxu0 0
        %2174 = vmatprep.subr.bf16.mxu0 0
        %2175 = vmatpush1.bf16.xpose.msra.mxu0 0
        %2176 = vmatprep.subr.bf16.mxu0 0
        %2177 = vmatpush1.bf16.xpose.msra.mxu0 0
        %2178 = vmatprep.subr.bf16.mxu0 0
        %2179 = vmatpush1.bf16.xpose.msra.mxu0 0
        %2180 = vmatprep.subr.bf16.mxu0 0
        %2181 = vmatpush1.bf16.xpose.msra.mxu0 0
        %2182 = vmatprep.subr.bf16.mxu0 0
        %2183 = vmatpush1.bf16.xpose.msra.mxu0 0
        %2184 = vmatprep.subr.bf16.mxu0 0
        %2185 = vmatpush1.bf16.xpose.msra.mxu0 0
        %2186 = vmatprep.subr.bf16.mxu0 0
        %2187 = vmatpush1.bf16.xpose.msra.mxu0 0
        %2188 = vmatprep.subr.bf16.mxu0 0
        %2189 = vmatpush1.bf16.xpose.msra.mxu0 0
        %2190 = vmatprep.subr.bf16.mxu0 0
        %2191 = vmatpush1.bf16.xpose.msra.mxu0 0
        %2192 = vmatprep.subr.bf16.mxu0 0
        %2193 = vmatpush1.bf16.xpose.msra.mxu0 0
        %2194 = vmatprep.subr.bf16.mxu0 0
        %2195 = vmatpush1.bf16.xpose.msra.mxu0 0
        %2196 = vmatprep.subr.bf16.mxu0 0
        %2197 = vmatpush1.bf16.xpose.msra.mxu0 0
        %2198 = vmatprep.mubr.bf16.mxu0 0
        %2199 = vmatmul.mubr.bf16.gmra.mrb[0].mxu0 %v2161
        %v2200 = vpop.f32.mrb[0].mxu0
        %v2201 = vadd.f32 0.0, %v2200
        %v2202 = vpop.f32.mrb[0].mxu0
        %v2203 = vpop.f32.mrb[0].mxu0
        %v2204 = vadd.f32 0.0, %v2203
        %v2205 = vpop.f32.mrb[0].mxu0
        %2206 = vdwg.mxu0
        %s2207 = scalar_lea.vmem %s3, 48
        %v2208 = vld [vmem:[%s2207] sm:$0xff]
        %v2209 = vld [vmem:[%s2207 + $0x8] sm:$0xff]
        %v2210 = vadd.f32 %v2208, %v431
        %v2211 = vadd.f32 %v2209, %v432
        %v2212 = vadd.f32 %v2208, %v433
        %v2213 = vadd.f32 %v2209, %v434
        %v2214 = vadd.f32 %v2208, %v435
        %v2215 = vadd.f32 %v2209, %v436
        %v2216 = vadd.f32 %v2208, %v437
        %v2217 = vadd.f32 %v2209, %v438
        %v2218 = vadd.f32 %v2048, %v2210
        %v2219 = vadd.f32 %v2051, %v2211
        %v2220 = vadd.f32 %v2099, %v2212
        %v2221 = vadd.f32 %v2102, %v2213
        %v2222 = vadd.f32 %v2150, %v2214
        %v2223 = vadd.f32 %v2153, %v2215
        %v2224 = vadd.f32 %v2201, %v2216
        %v2225 = vadd.f32 %v2204, %v2217
        %v2226 = vsel %vm658, %v2218, -inf
        %2227 = vmax.xlane.f32.xlu0 %v2226
        %v2228 = vpop.xlane.xlu0 %2227
        %v2229 = vsel %vm658, %v2219, -inf
        %2230 = vmax.xlane.f32.xlu0 %v2229
        %v2231 = vpop.xlane.xlu0 %2230
        %v2232 = vsel %vm658, %v2220, -inf
        %2233 = vmax.xlane.f32.xlu0 %v2232
        %v2234 = vpop.xlane.xlu0 %2233
        %v2235 = vsel %vm658, %v2221, -inf
        %2236 = vmax.xlane.f32.xlu0 %v2235
        %v2237 = vpop.xlane.xlu0 %2236
        %v2238 = vsel %vm658, %v2222, -inf
        %2239 = vmax.xlane.f32.xlu0 %v2238
        %v2240 = vpop.xlane.xlu0 %2239
        %v2241 = vsel %vm658, %v2223, -inf
        %2242 = vmax.xlane.f32.xlu0 %v2241
        %v2243 = vpop.xlane.xlu0 %2242
        %v2244 = vsel %vm658, %v2224, -inf
        %2245 = vmax.xlane.f32.xlu0 %v2244
        %v2246 = vpop.xlane.xlu0 %2245
        %v2247 = vsel %vm658, %v2225, -inf
        %2248 = vmax.xlane.f32.xlu0 %v2247
        %v2249 = vpop.xlane.xlu0 %2248
        %v2250 = vsub.f32 %v2218, %v2228
        %v2251 = vsub.f32 %v2219, %v2231
        %v2252 = vsub.f32 %v2220, %v2234
        %v2253 = vsub.f32 %v2221, %v2237
        %v2254 = vsub.f32 %v2222, %v2240
        %v2255 = vsub.f32 %v2223, %v2243
        %v2256 = vsub.f32 %v2224, %v2246
        %v2257 = vsub.f32 %v2225, %v2249
        %v2258 = vmul.f32 %v2250, 1.442695
        %v2259 = vpow.pop %v2258
        %v2260 = vmul.f32 %v2251, 1.442695
        %v2261 = vpow.pop %v2260
        %v2262 = vmul.f32 %v2252, 1.442695
        %v2263 = vpow.pop %v2262
        %v2264 = vmul.f32 %v2253, 1.442695
        %v2265 = vpow.pop %v2264
        %v2266 = vmul.f32 %v2254, 1.442695
        %v2267 = vpow.pop %v2266
        %v2268 = vmul.f32 %v2255, 1.442695
        %v2269 = vpow.pop %v2268
        %v2270 = vmul.f32 %v2256, 1.442695
        %v2271 = vpow.pop %v2270
        %v2272 = vmul.f32 %v2257, 1.442695
        %v2273 = vpow.pop %v2272
        %v2274 = vsel %vm658, %v2259, 0.0
        %2275 = vadd.xlane.f32.xlu0 %v2274
        %v2276 = vpop.xlane.xlu0 %2275
        %v2277 = vsel %vm658, %v2261, 0.0
        %2278 = vadd.xlane.f32.xlu0 %v2277
        %v2279 = vpop.xlane.xlu0 %2278
        %v2280 = vsel %vm658, %v2263, 0.0
        %2281 = vadd.xlane.f32.xlu0 %v2280
        %v2282 = vpop.xlane.xlu0 %2281
        %v2283 = vsel %vm658, %v2265, 0.0
        %2284 = vadd.xlane.f32.xlu0 %v2283
        %v2285 = vpop.xlane.xlu0 %2284
        %v2286 = vsel %vm658, %v2267, 0.0
        %2287 = vadd.xlane.f32.xlu0 %v2286
        %v2288 = vpop.xlane.xlu0 %2287
        %v2289 = vsel %vm658, %v2269, 0.0
        %2290 = vadd.xlane.f32.xlu0 %v2289
        %v2291 = vpop.xlane.xlu0 %2290
        %v2292 = vsel %vm658, %v2271, 0.0
        %2293 = vadd.xlane.f32.xlu0 %v2292
        %v2294 = vpop.xlane.xlu0 %2293
        %v2295 = vsel %vm658, %v2273, 0.0
        %2296 = vadd.xlane.f32.xlu0 %v2295
        %v2297 = vpop.xlane.xlu0 %2296
        %v2298 = vrcp.pop %v2276
        %v2299 = vrcp.pop %v2279
        %v2300 = vrcp.pop %v2282
        %v2301 = vrcp.pop %v2285
        %v2302 = vrcp.pop %v2288
        %v2303 = vrcp.pop %v2291
        %v2304 = vrcp.pop %v2294
        %v2305 = vrcp.pop %v2297
        %v2306 = vmul.f32 %v2259, %v2298
        %v2307 = vmul.f32 %v2261, %v2299
        %v2308 = vmul.f32 %v2263, %v2300
        %v2309 = vmul.f32 %v2265, %v2301
        %v2310 = vmul.f32 %v2267, %v2302
        %v2311 = vmul.f32 %v2269, %v2303
        %v2312 = vmul.f32 %v2271, %v2304
        %v2313 = vmul.f32 %v2273, %v2305
        %v2314 = vpack.c.bf16 %v2307, %v2306
        %v2315 = vpack.c.bf16 %v2309, %v2308
        %v2316 = vpack.c.bf16 %v2311, %v2310
        %v2317 = vpack.c.bf16 %v2313, %v2312
        %2318 = vrot.lane.b32.xlu0 %v427, 40
        %v2319 = vpop.permute.xlu0 %2318
        %v2322 = vsel %vm658, %v2314, 0
        %2324 = vmatprep.subr.bf16.mxu0 0
        %2325 = vmatpush1.bf16.msra.mxu0 %v2319
        %2326 = vmatprep.subr.bf16.mxu0 0
        %2327 = vmatpush1.bf16.msra.mxu0 0
        %2328 = vmatprep.subr.bf16.mxu0 0
        %2329 = vmatpush1.bf16.msra.mxu0 0
        %2330 = vmatprep.subr.bf16.mxu0 0
        %2331 = vmatpush1.bf16.msra.mxu0 0
        %2332 = vmatprep.subr.bf16.mxu0 0
        %2333 = vmatpush1.bf16.msra.mxu0 0
        %2334 = vmatprep.subr.bf16.mxu0 0
        %2335 = vmatpush1.bf16.msra.mxu0 0
        %2336 = vmatprep.subr.bf16.mxu0 0
        %2337 = vmatpush1.bf16.msra.mxu0 0
        %2338 = vmatprep.subr.bf16.mxu0 0
        %2339 = vmatpush1.bf16.msra.mxu0 0
        %2340 = vmatprep.subr.bf16.mxu0 0
        %2341 = vmatpush1.bf16.msra.mxu0 0
        %2342 = vmatprep.subr.bf16.mxu0 0
        %2343 = vmatpush1.bf16.msra.mxu0 0
        %2344 = vmatprep.subr.bf16.mxu0 0
        %2345 = vmatpush1.bf16.msra.mxu0 0
        %2346 = vmatprep.subr.bf16.mxu0 0
        %2347 = vmatpush1.bf16.msra.mxu0 0
        %2348 = vmatprep.subr.bf16.mxu0 0
        %2349 = vmatpush1.bf16.msra.mxu0 0
        %2350 = vmatprep.subr.bf16.mxu0 0
        %2351 = vmatpush1.bf16.msra.mxu0 0
        %2352 = vmatprep.subr.bf16.mxu0 0
        %2353 = vmatpush1.bf16.msra.mxu0 0
        %2354 = vmatprep.subr.bf16.mxu0 0
        %2355 = vmatpush1.bf16.msra.mxu0 0
        %2356 = vmatprep.mubr.bf16.mxu0 0
        %2357 = vmatmul.mubr.bf16.gmra.mrb[0].mxu0 %v2322
        %v2358 = vpop.f32.mrb[0].mxu0
        %v2359 = vadd.f32 0.0, %v2358
        %v2360 = vpop.f32.mrb[0].mxu0
        %v2361 = vpop.f32.mrb[0].mxu0
        %v2362 = vadd.f32 0.0, %v2361
        %v2363 = vpop.f32.mrb[0].mxu0
        %2364 = vdwg.mxu0
        %2365 = vrot.lane.b32.xlu0 %v428, 40
        %v2366 = vpop.permute.xlu0 %2365
        %v2369 = vsel %vm658, %v2315, 0
        %2371 = vmatprep.subr.bf16.mxu0 0
        %2372 = vmatpush1.bf16.msra.mxu0 %v2366
        %2373 = vmatprep.subr.bf16.mxu0 0
        %2374 = vmatpush1.bf16.msra.mxu0 0
        %2375 = vmatprep.subr.bf16.mxu0 0
        %2376 = vmatpush1.bf16.msra.mxu0 0
        %2377 = vmatprep.subr.bf16.mxu0 0
        %2378 = vmatpush1.bf16.msra.mxu0 0
        %2379 = vmatprep.subr.bf16.mxu0 0
        %2380 = vmatpush1.bf16.msra.mxu0 0
        %2381 = vmatprep.subr.bf16.mxu0 0
        %2382 = vmatpush1.bf16.msra.mxu0 0
        %2383 = vmatprep.subr.bf16.mxu0 0
        %2384 = vmatpush1.bf16.msra.mxu0 0
        %2385 = vmatprep.subr.bf16.mxu0 0
        %2386 = vmatpush1.bf16.msra.mxu0 0
        %2387 = vmatprep.subr.bf16.mxu0 0
        %2388 = vmatpush1.bf16.msra.mxu0 0
        %2389 = vmatprep.subr.bf16.mxu0 0
        %2390 = vmatpush1.bf16.msra.mxu0 0
        %2391 = vmatprep.subr.bf16.mxu0 0
        %2392 = vmatpush1.bf16.msra.mxu0 0
        %2393 = vmatprep.subr.bf16.mxu0 0
        %2394 = vmatpush1.bf16.msra.mxu0 0
        %2395 = vmatprep.subr.bf16.mxu0 0
        %2396 = vmatpush1.bf16.msra.mxu0 0
        %2397 = vmatprep.subr.bf16.mxu0 0
        %2398 = vmatpush1.bf16.msra.mxu0 0
        %2399 = vmatprep.subr.bf16.mxu0 0
        %2400 = vmatpush1.bf16.msra.mxu0 0
        %2401 = vmatprep.subr.bf16.mxu0 0
        %2402 = vmatpush1.bf16.msra.mxu0 0
        %2403 = vmatprep.mubr.bf16.mxu0 0
        %2404 = vmatmul.mubr.bf16.gmra.mrb[0].mxu0 %v2369
        %v2405 = vpop.f32.mrb[0].mxu0
        %v2406 = vadd.f32 0.0, %v2405
        %v2407 = vpop.f32.mrb[0].mxu0
        %v2408 = vpop.f32.mrb[0].mxu0
        %v2409 = vadd.f32 0.0, %v2408
        %v2410 = vpop.f32.mrb[0].mxu0
        %2411 = vdwg.mxu0
        %2412 = vrot.lane.b32.xlu0 %v429, 40
        %v2413 = vpop.permute.xlu0 %2412
        %v2416 = vsel %vm658, %v2316, 0
        %2418 = vmatprep.subr.bf16.mxu0 0
        %2419 = vmatpush1.bf16.msra.mxu0 %v2413
        %2420 = vmatprep.subr.bf16.mxu0 0
        %2421 = vmatpush1.bf16.msra.mxu0 0
        %2422 = vmatprep.subr.bf16.mxu0 0
        %2423 = vmatpush1.bf16.msra.mxu0 0
        %2424 = vmatprep.subr.bf16.mxu0 0
        %2425 = vmatpush1.bf16.msra.mxu0 0
        %2426 = vmatprep.subr.bf16.mxu0 0
        %2427 = vmatpush1.bf16.msra.mxu0 0
        %2428 = vmatprep.subr.bf16.mxu0 0
        %2429 = vmatpush1.bf16.msra.mxu0 0
        %2430 = vmatprep.subr.bf16.mxu0 0
        %2431 = vmatpush1.bf16.msra.mxu0 0
        %2432 = vmatprep.subr.bf16.mxu0 0
        %2433 = vmatpush1.bf16.msra.mxu0 0
        %2434 = vmatprep.subr.bf16.mxu0 0
        %2435 = vmatpush1.bf16.msra.mxu0 0
        %2436 = vmatprep.subr.bf16.mxu0 0
        %2437 = vmatpush1.bf16.msra.mxu0 0
        %2438 = vmatprep.subr.bf16.mxu0 0
        %2439 = vmatpush1.bf16.msra.mxu0 0
        %2440 = vmatprep.subr.bf16.mxu0 0
        %2441 = vmatpush1.bf16.msra.mxu0 0
        %2442 = vmatprep.subr.bf16.mxu0 0
        %2443 = vmatpush1.bf16.msra.mxu0 0
        %2444 = vmatprep.subr.bf16.mxu0 0
        %2445 = vmatpush1.bf16.msra.mxu0 0
        %2446 = vmatprep.subr.bf16.mxu0 0
        %2447 = vmatpush1.bf16.msra.mxu0 0
        %2448 = vmatprep.subr.bf16.mxu0 0
        %2449 = vmatpush1.bf16.msra.mxu0 0
        %2450 = vmatprep.mubr.bf16.mxu0 0
        %2451 = vmatmul.mubr.bf16.gmra.mrb[0].mxu0 %v2416
        %v2452 = vpop.f32.mrb[0].mxu0
        %v2453 = vadd.f32 0.0, %v2452
        %v2454 = vpop.f32.mrb[0].mxu0
        %v2455 = vpop.f32.mrb[0].mxu0
        %v2456 = vadd.f32 0.0, %v2455
        %v2457 = vpop.f32.mrb[0].mxu0
        %2458 = vdwg.mxu0
        %2459 = vrot.lane.b32.xlu0 %v430, 40
        %v2460 = vpop.permute.xlu0 %2459
        %v2463 = vsel %vm658, %v2317, 0
        %2465 = vmatprep.subr.bf16.mxu0 0
        %2466 = vmatpush1.bf16.msra.mxu0 %v2460
        %2467 = vmatprep.subr.bf16.mxu0 0
        %2468 = vmatpush1.bf16.msra.mxu0 0
        %2469 = vmatprep.subr.bf16.mxu0 0
        %2470 = vmatpush1.bf16.msra.mxu0 0
        %2471 = vmatprep.subr.bf16.mxu0 0
        %2472 = vmatpush1.bf16.msra.mxu0 0
        %2473 = vmatprep.subr.bf16.mxu0 0
        %2474 = vmatpush1.bf16.msra.mxu0 0
        %2475 = vmatprep.subr.bf16.mxu0 0
        %2476 = vmatpush1.bf16.msra.mxu0 0
        %2477 = vmatprep.subr.bf16.mxu0 0
        %2478 = vmatpush1.bf16.msra.mxu0 0
        %2479 = vmatprep.subr.bf16.mxu0 0
        %2480 = vmatpush1.bf16.msra.mxu0 0
        %2481 = vmatprep.subr.bf16.mxu0 0
        %2482 = vmatpush1.bf16.msra.mxu0 0
        %2483 = vmatprep.subr.bf16.mxu0 0
        %2484 = vmatpush1.bf16.msra.mxu0 0
        %2485 = vmatprep.subr.bf16.mxu0 0
        %2486 = vmatpush1.bf16.msra.mxu0 0
        %2487 = vmatprep.subr.bf16.mxu0 0
        %2488 = vmatpush1.bf16.msra.mxu0 0
        %2489 = vmatprep.subr.bf16.mxu0 0
        %2490 = vmatpush1.bf16.msra.mxu0 0
        %2491 = vmatprep.subr.bf16.mxu0 0
        %2492 = vmatpush1.bf16.msra.mxu0 0
        %2493 = vmatprep.subr.bf16.mxu0 0
        %2494 = vmatpush1.bf16.msra.mxu0 0
        %2495 = vmatprep.subr.bf16.mxu0 0
        %2496 = vmatpush1.bf16.msra.mxu0 0
        %2497 = vmatprep.mubr.bf16.mxu0 0
        %2498 = vmatmul.mubr.bf16.gmra.mrb[0].mxu0 %v2463
        %v2499 = vpop.f32.mrb[0].mxu0
        %v2500 = vadd.f32 0.0, %v2499
        %v2501 = vpop.f32.mrb[0].mxu0
        %v2502 = vpop.f32.mrb[0].mxu0
        %v2503 = vadd.f32 0.0, %v2502
        %v2504 = vpop.f32.mrb[0].mxu0
        %2505 = vdwg.mxu0
        %v2506 = vpack.c.bf16 %v2362, %v2359
        %v2507 = vpack.c.bf16 %v2409, %v2406
        %v2508 = vpack.c.bf16 %v2456, %v2453
        %v2509 = vpack.c.bf16 %v2503, %v2500
        %2514 = vrot.lane.b32.xlu0 %v2506, 24
        %v2515 = vpop.permute.xlu0 %2514
        %2516 = vrot.lane.b32.xlu0 %v2507, 24
        %v2517 = vpop.permute.xlu0 %2516
        %2518 = vrot.lane.b32.xlu0 %v2508, 24
        %v2519 = vpop.permute.xlu0 %2518
        %2520 = vrot.lane.b32.xlu0 %v2509, 24
        %v2521 = vpop.permute.xlu0 %2520
        %vm2526 = vcmask 261312
        %2527 = vst.msk [vmem:[#allocation2] sm:$0xff] %vm2526, %v2515
        %2528 = vst.msk [vmem:[#allocation2 + $0x8] sm:$0xff] %vm2526, %v2517
        %2529 = vst.msk [vmem:[#allocation2 + $0x10] sm:$0xff] %vm2526, %v2519
        %2530 = vst.msk [vmem:[#allocation2 + $0x18] sm:$0xff] %vm2526, %v2521
        %v2531 = vld [vmem:[#allocation2] sm:$0xff]
        %v2532 = vld [vmem:[#allocation2 + $0x8] sm:$0xff]
        %v2533 = vld [vmem:[#allocation2 + $0x10] sm:$0xff]
        %v2534 = vld [vmem:[#allocation2 + $0x18] sm:$0xff]
        %v2535 = vld [vmem:[%s5] sm:$0xf]
        %v2536 = vld [vmem:[%s5 + $0x4] sm:$0xf]
        %v2537 = vld [vmem:[%s5 + $0x8] sm:$0xf]
        %v2538 = vld [vmem:[%s5 + $0xc] sm:$0xf]
        %v2539 = vld [vmem:[%s6] sm:$0x1]
        %v2541 = vlaneseq
        %v2542 = vshrl.u32 %v2541, 7
        %v2543 = vsub.s32 0, %v2542
        %v2544 = vrot.slane %v2539, %v2543
        %v2550 = vunpack.c.l.b16 %v2535
        %v2551 = vunpack.c.l.b16 %v2536
        %v2552 = vunpack.c.l.b16 %v2537
        %v2553 = vunpack.c.l.b16 %v2538
        %v2554 = vpack.c.b16 %v2551, %v2550
        %v2555 = vpack.c.b16 %v2553, %v2552
        %v2559 = vsel %vm349, %v2531, 0
        %v2562 = vsel %vm349, %v2532, 0
        %v2565 = vsel %vm349, %v2533, 0
        %v2568 = vsel %vm349, %v2534, 0
        %2570 = vmatprep.subr.bf16.mxu0 0
        %2571 = vmatpush1.bf16.msra.mxu0 %v2554
        %2572 = vmatprep.subr.bf16.mxu0 0
        %2573 = vmatpush1.bf16.msra.mxu0 %v2555
        %2574 = vmatprep.subr.bf16.mxu0 0
        %2575 = vmatpush1.bf16.msra.mxu0 0
        %2576 = vmatprep.subr.bf16.mxu0 0
        %2577 = vmatpush1.bf16.msra.mxu0 0
        %2578 = vmatprep.subr.bf16.mxu0 0
        %2579 = vmatpush1.bf16.msra.mxu0 0
        %2580 = vmatprep.subr.bf16.mxu0 0
        %2581 = vmatpush1.bf16.msra.mxu0 0
        %2582 = vmatprep.subr.bf16.mxu0 0
        %2583 = vmatpush1.bf16.msra.mxu0 0
        %2584 = vmatprep.subr.bf16.mxu0 0
        %2585 = vmatpush1.bf16.msra.mxu0 0
        %2586 = vmatprep.subr.bf16.mxu0 0
        %2587 = vmatpush1.bf16.msra.mxu0 0
        %2588 = vmatprep.subr.bf16.mxu0 0
        %2589 = vmatpush1.bf16.msra.mxu0 0
        %2590 = vmatprep.subr.bf16.mxu0 0
        %2591 = vmatpush1.bf16.msra.mxu0 0
        %2592 = vmatprep.subr.bf16.mxu0 0
        %2593 = vmatpush1.bf16.msra.mxu0 0
        %2594 = vmatprep.subr.bf16.mxu0 0
        %2595 = vmatpush1.bf16.msra.mxu0 0
        %2596 = vmatprep.subr.bf16.mxu0 0
        %2597 = vmatpush1.bf16.msra.mxu0 0
        %2598 = vmatprep.subr.bf16.mxu0 0
        %2599 = vmatpush1.bf16.msra.mxu0 0
        %2600 = vmatprep.subr.bf16.mxu0 0
        %2601 = vmatpush1.bf16.msra.mxu0 0
        %2602 = vmatprep.mubr.bf16.mxu0 0
        %2603 = vmatmul.mubr.bf16.gmra.mrb[0].mxu0 %v2559
        %v2604 = vpop.f32.mrb[0].mxu0
        %v2605 = vadd.f32 %v2544, %v2604
        %v2606 = vpop.f32.mrb[0].mxu0
        %v2607 = vpop.f32.mrb[0].mxu0
        %v2608 = vadd.f32 %v2544, %v2607
        %v2609 = vpop.f32.mrb[0].mxu0
        %2610 = vmatprep.mubr.bf16.mxu0 0
        %2611 = vmatmul.mubr.bf16.gmra.mrb[0].mxu0 %v2562
        %v2612 = vpop.f32.mrb[0].mxu0
        %v2613 = vadd.f32 %v2544, %v2612
        %v2614 = vpop.f32.mrb[0].mxu0
        %v2615 = vpop.f32.mrb[0].mxu0
        %v2616 = vadd.f32 %v2544, %v2615
        %v2617 = vpop.f32.mrb[0].mxu0
        %2618 = vmatprep.mubr.bf16.mxu0 0
        %2619 = vmatmul.mubr.bf16.gmra.mrb[0].mxu0 %v2565
        %v2620 = vpop.f32.mrb[0].mxu0
        %v2621 = vadd.f32 %v2544, %v2620
        %v2622 = vpop.f32.mrb[0].mxu0
        %v2623 = vpop.f32.mrb[0].mxu0
        %v2624 = vadd.f32 %v2544, %v2623
        %v2625 = vpop.f32.mrb[0].mxu0
        %2626 = vmatprep.mubr.bf16.mxu0 0
        %2627 = vmatmul.mubr.bf16.gmra.mrb[0].mxu0 %v2568
        %v2628 = vpop.f32.mrb[0].mxu0
        %v2629 = vadd.f32 %v2544, %v2628
        %v2630 = vpop.f32.mrb[0].mxu0
        %v2631 = vpop.f32.mrb[0].mxu0
        %v2632 = vadd.f32 %v2544, %v2631
        %v2633 = vpop.f32.mrb[0].mxu0
        %2634 = vdwg.mxu0
        %2635 = vst.msk [vmem:[%s295] sm:$0xff] %vm349, %v2605
        %2636 = vst.msk [vmem:[%s295 + $0x8] sm:$0xff] %vm349, %v2608
        %2637 = vst.msk [vmem:[%s295 + $0x10] sm:$0xff] %vm349, %v2613
        %2638 = vst.msk [vmem:[%s295 + $0x18] sm:$0xff] %vm349, %v2616
        %2639 = vst.msk [vmem:[%s295 + $0x20] sm:$0xff] %vm349, %v2621
        %2640 = vst.msk [vmem:[%s295 + $0x28] sm:$0xff] %vm349, %v2624
        %2641 = vst.msk [vmem:[%s295 + $0x30] sm:$0xff] %vm349, %v2629
        %2642 = vst.msk [vmem:[%s295 + $0x38] sm:$0xff] %vm349, %v2632
        %s2643 = smul.u32 8, %s19
        %p2644 = scmp.lt.s32.totalorder %s2643, 15
        %s2645 = scalar_select %p2644, %s2643, 15
        %s2646 = smul.addr %s2645, 8
        %s2647 = scalar_lea.vmem %s7, %s2646
        // Predicated region
        $region53: #{tpu_custom_call.1} parent=47 // pred_check
          %p2648 = pneg %p189
        $region54: #{tpu_custom_call.1} parent=47 // pred_check_branch
          %2650 = sbr.rel (%p2648) target = $region56
        $region55: #{tpu_custom_call.1} parent=47 // pred_region
          %s2651 = smul.u32 8, %s19
        $region56: #{tpu_custom_call.1} parent=47 // pred_fallthru
          _
      $region48: #{tpu_custom_call.1} parent=5 // pred_fallthru
        _
      %p2652 = scmp.le.s32.totalorder 2, %s14
      // Predicated region
      $region57: #{tpu_custom_call.1} parent=5 // pred_check
        %p2653 = pneg %p2652
      $region58: #{tpu_custom_call.1} parent=5 // pred_check_branch
        %2655 = sbr.rel (%p2653) target = $region60
      $region59: #{tpu_custom_call.1} parent=5 // pred_region
        %s2656 = ssub.s32 %s14, 2
        // Predicated region
        $region61: #{tpu_custom_call.1} parent=59 // pred_check
          %p2657 = pneg %p195
        $region62: #{tpu_custom_call.1} parent=59 // pred_check_branch
          %2659 = sbr.rel (%p2657) target = $region64
        $region63: #{tpu_custom_call.1} parent=59 // pred_region
          %s2660 = smul.u32 8, %s20
          %p2661 = scmp.lt.s32.totalorder %s2660, 15
          %s2662 = scalar_select %p2661, %s2660, 15
          %s2663 = smul.addr %s2662, 8
          %s2664 = scalar_lea.vmem %s7, %s2663
        $region64: #{tpu_custom_call.1} parent=59 // pred_fallthru
          _
      $region60: #{tpu_custom_call.1} parent=5 // pred_fallthru
        _
    $region6: #{tpu_custom_call.1} parent=1 // loop_footer
      %s18 = sadd.s32 1, %s14
    $region7: #{tpu_custom_call.1} parent=1 // loop_footer_branch
      %13 = sbr.rel target = $region3
    $region8: #{tpu_custom_call.1} parent=1 // loop_exit
      _
    %2665 = vsyncpa [#allocation4], 1
    %s2666 = scalar_lea.sflag [#allocation4], 1
    %2667 = vsyncpa %s2666, 1

</llo_original>
